<compile_context>
chip_gen: v7x
topology: tpu7x:2x2x1
jax: 0.10.0
libtpu: 0.0.40
codegen_flags: <defaults>
</compile_context>

<pallas_src>
import jax
import jax.numpy as jnp
from jax import lax
from jax.experimental import pallas as pl
from jax.experimental.pallas import tpu as pltpu


def _vmem_capacity_bytes():
    """Per-core VMEM capacity (trace-time query, conservative fallback)."""
    try:
        return int(pltpu.get_tpu_info().vmem_capacity_bytes)
    except Exception:
        return 64 << 20  # v7x per-TensorCore VMEM is the binding constraint.


# ----------------------------------------------------------------------------------
# Shared helpers (traced inside the kernels).
# ----------------------------------------------------------------------------------
def _read_fix_scalars(off_smem, nrows_smem, s_dim, b_dim):
    """Hoist all SMEM scalar reads (before any DMA .wait())."""
    offs = [off_smem[b] for b in range(b_dim)]
    lens = [jnp.minimum(s_dim - offs[b] - 1, nrows_smem[b]) for b in range(b_dim)]
    return offs, lens


def _scatter_fix_band(b, off, emb_len, fix_ref, out_ref):
    """Overwrite rows off+1 .. off+emb_len of out_ref[b] with fix rows 0..emb_len-1.

    Only the (at most F) band rows are touched -- O(F*H) stores, never a full
    (S, H) compare/select pass, so it scales to textual-inversion F ~ 75.
    """
    f_dim = fix_ref.shape[1]
    for j in range(f_dim):
        @pl.when(j < emb_len)
        def _():
            out_ref[b, pl.ds(off + 1 + j, 1), :] = (
                fix_ref[b, pl.ds(j, 1), :].astype(out_ref.dtype))


# ----------------------------------------------------------------------------------
# Fast path: embedding table VMEM-resident (one bulk pipelined DMA), on-chip gather.
# ----------------------------------------------------------------------------------
def _embeddings_vmem_kernel(ids_smem, off_smem, nrows_smem,   # SMEM (scalar prefetch)
                            table_ref, fix_ref,               # VMEM inputs
                            out_ref):                         # VMEM output block
    b_dim, s_dim, _ = out_ref.shape

    # 1) Lookup: per token, one dynamic-sublane vld from the resident table and one
    #    lane-dense (1, H) vst straight into the output block (no scratch, no DMA).
    # TODO(synk): a vectorized in-VMEM gather (jnp.take on the table ref) could
    #             replace this scalar loop on Mosaic versions that support it.
    for b in range(b_dim):
        for s in range(s_dim):
            out_ref[b, pl.ds(s, 1), :] = table_ref[pl.ds(ids_smem[b, s], 1), :]

    # 2) Fix scatter: band rows only.
    offs, lens = _read_fix_scalars(off_smem, nrows_smem, s_dim, b_dim)
    for b in range(b_dim):
        _scatter_fix_band(b, offs[b], lens[b], fix_ref, out_ref)


# ----------------------------------------------------------------------------------
# Slow path: table stays in HBM; rows are DMA'd directly into the output block.
# ----------------------------------------------------------------------------------
def _embeddings_hbm_kernel(ids_smem, off_smem, nrows_smem,    # SMEM (scalar prefetch)
                           table_hbm, fix_ref,                # HBM table, VMEM fixes
                           out_ref,                           # VMEM output block
                           sem_ref):                          # per-batch DMA sems
    b_dim, s_dim, _ = out_ref.shape

    def start_wave(b):
        # One wave of S row copies per batch element on its own semaphore; the
        # descriptors are kept so the waits re-use them (no SMEM re-reads).
        cps = []
        for s in range(s_dim):
            cp = pltpu.make_async_copy(
                table_hbm.at[pl.ds(ids_smem[b, s], 1), :],
                out_ref.at[b, pl.ds(s, 1), :],
                sem_ref.at[b])
            cp.start()
            cps.append(cp)
        return cps

    # Scalar reads hoisted before the first .wait() (sst->sld forwarding).
    offs, lens = _read_fix_scalars(off_smem, nrows_smem, s_dim, b_dim)

    pending = start_wave(0)
    for b in range(b_dim):
        nxt = start_wave(b + 1) if b + 1 < b_dim else []   # overlap next wave's DMAs
        for cp in pending:                                  # wait on ORIGINAL descriptors
            cp.wait()
        pending = nxt
        _scatter_fix_band(b, offs[b], lens[b], fix_ref, out_ref)


# ----------------------------------------------------------------------------------
# Wrapper
# ----------------------------------------------------------------------------------
def embeddings_with_fixes(input_ids, table, offsets, nrows, fix_vecs, *, force_hbm=False):
    """EmbeddingsWithFixes.forward.

    input_ids : (B, S) int token ids
    table     : (V, H) weight of the wrapped nn.Embedding
    offsets   : (B,)   fix offset per batch element (one fix per element)
    nrows     : (B,)   rows in that fix's embedding.vec (0 == no fix / early return)
    fix_vecs  : (B, F, H) fix vectors, row-padded to F (only nrows[b] rows are used)
    """
    b, s = input_ids.shape
    v, h = table.shape
    f = fix_vecs.shape[1]

    # Mirror devices.cond_cast_unet: fixes are cast to the model dtype.
    fix_vecs = fix_vecs.astype(table.dtype)
    # Pad the fix-row axis to a sublane multiple; padded rows are never selected
    # because nrows[b] <= F.
    f_pad = ((f + 7) // 8) * 8
    if f_pad != f:
        fix_vecs = jnp.pad(fix_vecs, ((0, 0), (0, f_pad - f), (0, 0)))

    input_ids = input_ids.astype(jnp.int32)
    offsets = offsets.astype(jnp.int32)
    nrows = nrows.astype(jnp.int32)
    out_shape = jax.ShapeDtypeStruct((b, s, h), table.dtype)

    itemsize = jnp.dtype(table.dtype).itemsize
    table_bytes = v * h * itemsize
    out_bytes = b * s * h * itemsize
    fix_bytes = b * f_pad * h * itemsize
    vmem_cap = _vmem_capacity_bytes()
    # Budget double-buffered blocks + slack; keep the VMEM-resident-table fast path
    # only when it comfortably fits (v7x's 64 MiB is the binding constraint).
    needed = 2 * (table_bytes + out_bytes + fix_bytes) + (1 << 20)
    use_vmem_table = (not force_hbm) and (needed <= (3 * vmem_cap) // 4)

    # TODO(synk): for real batch sizes on v7x (2 TensorCores) put the batch axis on the
    #             grid marked "parallel"; keep the fused single step on single-TC
    #             v5e/v6e to avoid ~0.35us/step grid overhead.
    if use_vmem_table:
        params = dict(dimension_semantics=("arbitrary",))
        if needed > (16 << 20):  # raise the scoped-VMEM limit only when required
            params["vmem_limit_bytes"] = int(min(vmem_cap, needed))
        grid_spec = pltpu.PrefetchScalarGridSpec(
            num_scalar_prefetch=3,                                   # ids, offsets, nrows
            grid=(1,),                                               # batch fused: tiny work/step
            in_specs=[
                pl.BlockSpec((v, h), lambda i, *_: (0, 0)),          # table, VMEM-resident
                pl.BlockSpec((b, f_pad, h), lambda i, *_: (0, 0, 0)),
            ],
            out_specs=pl.BlockSpec((b, s, h), lambda i, *_: (0, 0, 0)),
        )
        return pl.pallas_call(
            _embeddings_vmem_kernel,
            out_shape=out_shape,
            grid_spec=grid_spec,
            compiler_params=pltpu.CompilerParams(**params),
        )(input_ids, offsets, nrows, table, fix_vecs)

    # HBM-gather fallback (production vocabs that do not fit VMEM, esp. on v7x).
    grid_spec = pltpu.PrefetchScalarGridSpec(
        num_scalar_prefetch=3,                                       # ids, offsets, nrows
        grid=(1,),
        in_specs=[
            pl.BlockSpec(memory_space=pl.ANY),                       # table stays in HBM
            pl.BlockSpec((b, f_pad, h), lambda i, *_: (0, 0, 0)),
        ],
        out_specs=pl.BlockSpec((b, s, h), lambda i, *_: (0, 0, 0)),
        scratch_shapes=[pltpu.SemaphoreType.DMA((b,))],              # one sem per wave
    )
    return pl.pallas_call(
        _embeddings_hbm_kernel,
        out_shape=out_shape,
        grid_spec=grid_spec,
        compiler_params=pltpu.CompilerParams(dimension_semantics=("arbitrary",)),
    )(input_ids, offsets, nrows, table, fix_vecs)


# ----------------------------------------------------------------------------------
# Pure-JAX reference (transcription of the PyTorch forward).
# ----------------------------------------------------------------------------------
def reference(input_ids, table, offsets, nrows, fix_vecs):
    emb = table[input_ids]
    out = []
    for b in range(input_ids.shape[0]):
        t = emb[b]
        off = int(offsets[b])
        n = int(nrows[b])
        emb_len = max(min(t.shape[0] - off - 1, n), 0)
        t = jnp.concatenate(
            [t[:off + 1], fix_vecs[b, :emb_len], t[off + 1 + emb_len:]], axis=0)
        out.append(t)
    return jnp.stack(out)


if __name__ == "__main__":
    B, S, H, V, F = 2, 16, 128, 64, 4   # batch, seq, hidden, vocab, max fix rows

    key = jax.random.PRNGKey(0)
    k1, k2, k3 = jax.random.split(key, 3)
    input_ids = jax.random.randint(k1, (B, S), 0, V, dtype=jnp.int32)
    table = jax.random.normal(k2, (V, H), dtype=jnp.float32)          # wrapped embedding weight
    fix_vecs = jax.random.normal(k3, (B, F, H), dtype=jnp.float32)    # embedding.vec per fix
    offsets = jnp.array([3, 12], dtype=jnp.int32)                     # 2nd one exercises clipping
    nrows = jnp.array([F, F], dtype=jnp.int32)

    ref = reference(input_ids, table, offsets, nrows, fix_vecs)

    # Fast path: table resident in VMEM (always taken at these shapes).
    out_fast = jax.block_until_ready(
        embeddings_with_fixes(input_ids, table, offsets, nrows, fix_vecs))
    assert out_fast.shape == (B, S, H)
    assert jnp.allclose(out_fast, ref, atol=1e-5), float(jnp.max(jnp.abs(out_fast - ref)))

    # "No fixes" early-return equivalence (nrows == 0 -> plain embedding lookup).
    out_nofix = jax.block_until_ready(
        embeddings_with_fixes(input_ids, table, offsets,
                              jnp.zeros((B,), jnp.int32), fix_vecs))
    assert jnp.allclose(out_nofix, table[input_ids], atol=1e-5)

    # HBM fallback path (forced; what production vocabs would take on v7x).
    out_hbm = jax.block_until_ready(
        embeddings_with_fixes(input_ids, table, offsets, nrows, fix_vecs, force_hbm=True))
    assert jnp.allclose(out_hbm, ref, atol=1e-5), float(jnp.max(jnp.abs(out_hbm - ref)))

    print("KERNEL_OK")
</pallas_src>

<mosaic_0001>
module attributes {stable_mosaic.version = 11 : i64} {
  func.func @_embeddings_vmem_kernel(%arg0: i32, %arg1: memref<2x16xi32, #tpu.memory_space<smem>>, %arg2: memref<2xi32, #tpu.memory_space<smem>>, %arg3: memref<2xi32, #tpu.memory_space<smem>>, %arg4: memref<64x128xf32, #tpu.memory_space<vmem>>, %arg5: memref<2x8x128xf32, #tpu.memory_space<vmem>>, %arg6: memref<2x16x128xf32, #tpu.memory_space<vmem>>) attributes {dimension_semantics = [#tpu.dimension_semantics<arbitrary>], iteration_bounds = array<i64: 1>, scalar_prefetch = 3 : i64, scratch_operands = 0 : i64, tpu.core_type = #tpu.core_type<tc>, window_params = [{pipeline_mode = #tpu.pipeline_mode<synchronous>, transform_indices = @transform_0, window_bounds = array<i64: 64, 128>}, {pipeline_mode = #tpu.pipeline_mode<synchronous>, transform_indices = @transform_1, window_bounds = array<i64: 2, 8, 128>}, {pipeline_mode = #tpu.pipeline_mode<synchronous>, transform_indices = @transform_2, window_bounds = array<i64: 2, 16, 128>}]} {
    %c0 = arith.constant 0 : index
    %c0_0 = arith.constant 0 : index
    %0 = memref.load %arg1[%c0, %c0_0] : memref<2x16xi32, #tpu.memory_space<smem>>
    %1 = arith.index_cast %0 : i32 to index
    %c0_1 = arith.constant 0 : index
    %2 = vector.load %arg4[%1, %c0_1] : memref<64x128xf32, #tpu.memory_space<vmem>>, vector<1x128xf32>
    %c0_2 = arith.constant 0 : index
    %c0_3 = arith.constant 0 : index
    %c0_4 = arith.constant 0 : index
    %3 = vector.load %arg6[%c0_2, %c0_3, %c0_4] : memref<2x16x128xf32, #tpu.memory_space<vmem>>, vector<1x1x128xf32>
    %4 = vector.shape_cast %3 : vector<1x1x128xf32> to vector<1x128xf32>
    %5 = vector.shape_cast %2 : vector<1x128xf32> to vector<1x1x128xf32>
    tpu.vector_store %arg6[%c0_2, %c0_3, %c0_4], %5 {strides = array<i32>} : memref<2x16x128xf32, #tpu.memory_space<vmem>>, vector<1x1x128xf32>,
    %c0_5 = arith.constant 0 : index
    %c1 = arith.constant 1 : index
    %6 = memref.load %arg1[%c0_5, %c1] : memref<2x16xi32, #tpu.memory_space<smem>>
    %7 = arith.index_cast %6 : i32 to index
    %c0_6 = arith.constant 0 : index
    %8 = vector.load %arg4[%7, %c0_6] : memref<64x128xf32, #tpu.memory_space<vmem>>, vector<1x128xf32>
    %c0_7 = arith.constant 0 : index
    %c1_8 = arith.constant 1 : index
    %c0_9 = arith.constant 0 : index
    %9 = vector.load %arg6[%c0_7, %c1_8, %c0_9] : memref<2x16x128xf32, #tpu.memory_space<vmem>>, vector<1x1x128xf32>
    %10 = vector.shape_cast %9 : vector<1x1x128xf32> to vector<1x128xf32>
    %11 = vector.shape_cast %8 : vector<1x128xf32> to vector<1x1x128xf32>
    tpu.vector_store %arg6[%c0_7, %c1_8, %c0_9], %11 {strides = array<i32>} : memref<2x16x128xf32, #tpu.memory_space<vmem>>, vector<1x1x128xf32>,
    %c0_10 = arith.constant 0 : index
    %c2 = arith.constant 2 : index
    %12 = memref.load %arg1[%c0_10, %c2] : memref<2x16xi32, #tpu.memory_space<smem>>
    %13 = arith.index_cast %12 : i32 to index
    %c0_11 = arith.constant 0 : index
    %14 = vector.load %arg4[%13, %c0_11] : memref<64x128xf32, #tpu.memory_space<vmem>>, vector<1x128xf32>
    %c0_12 = arith.constant 0 : index
    %c2_13 = arith.constant 2 : index
    %c0_14 = arith.constant 0 : index
    %15 = vector.load %arg6[%c0_12, %c2_13, %c0_14] : memref<2x16x128xf32, #tpu.memory_space<vmem>>, vector<1x1x128xf32>
    %16 = vector.shape_cast %15 : vector<1x1x128xf32> to vector<1x128xf32>
    %17 = vector.shape_cast %14 : vector<1x128xf32> to vector<1x1x128xf32>
    tpu.vector_store %arg6[%c0_12, %c2_13, %c0_14], %17 {strides = array<i32>} : memref<2x16x128xf32, #tpu.memory_space<vmem>>, vector<1x1x128xf32>,
    %c0_15 = arith.constant 0 : index
    %c3 = arith.constant 3 : index
    %18 = memref.load %arg1[%c0_15, %c3] : memref<2x16xi32, #tpu.memory_space<smem>>
    %19 = arith.index_cast %18 : i32 to index
    %c0_16 = arith.constant 0 : index
    %20 = vector.load %arg4[%19, %c0_16] : memref<64x128xf32, #tpu.memory_space<vmem>>, vector<1x128xf32>
    %c0_17 = arith.constant 0 : index
    %c3_18 = arith.constant 3 : index
    %c0_19 = arith.constant 0 : index
    %21 = vector.load %arg6[%c0_17, %c3_18, %c0_19] : memref<2x16x128xf32, #tpu.memory_space<vmem>>, vector<1x1x128xf32>
    %22 = vector.shape_cast %21 : vector<1x1x128xf32> to vector<1x128xf32>
    %23 = vector.shape_cast %20 : vector<1x128xf32> to vector<1x1x128xf32>
    tpu.vector_store %arg6[%c0_17, %c3_18, %c0_19], %23 {strides = array<i32>} : memref<2x16x128xf32, #tpu.memory_space<vmem>>, vector<1x1x128xf32>,
    %c0_20 = arith.constant 0 : index
    %c4 = arith.constant 4 : index
    %24 = memref.load %arg1[%c0_20, %c4] : memref<2x16xi32, #tpu.memory_space<smem>>
    %25 = arith.index_cast %24 : i32 to index
    %c0_21 = arith.constant 0 : index
    %26 = vector.load %arg4[%25, %c0_21] : memref<64x128xf32, #tpu.memory_space<vmem>>, vector<1x128xf32>
    %c0_22 = arith.constant 0 : index
    %c4_23 = arith.constant 4 : index
    %c0_24 = arith.constant 0 : index
    %27 = vector.load %arg6[%c0_22, %c4_23, %c0_24] : memref<2x16x128xf32, #tpu.memory_space<vmem>>, vector<1x1x128xf32>
    %28 = vector.shape_cast %27 : vector<1x1x128xf32> to vector<1x128xf32>
    %29 = vector.shape_cast %26 : vector<1x128xf32> to vector<1x1x128xf32>
    tpu.vector_store %arg6[%c0_22, %c4_23, %c0_24], %29 {strides = array<i32>} : memref<2x16x128xf32, #tpu.memory_space<vmem>>, vector<1x1x128xf32>,
    %c0_25 = arith.constant 0 : index
    %c5 = arith.constant 5 : index
    %30 = memref.load %arg1[%c0_25, %c5] : memref<2x16xi32, #tpu.memory_space<smem>>
    %31 = arith.index_cast %30 : i32 to index
    %c0_26 = arith.constant 0 : index
    %32 = vector.load %arg4[%31, %c0_26] : memref<64x128xf32, #tpu.memory_space<vmem>>, vector<1x128xf32>
    %c0_27 = arith.constant 0 : index
    %c5_28 = arith.constant 5 : index
    %c0_29 = arith.constant 0 : index
    %33 = vector.load %arg6[%c0_27, %c5_28, %c0_29] : memref<2x16x128xf32, #tpu.memory_space<vmem>>, vector<1x1x128xf32>
    %34 = vector.shape_cast %33 : vector<1x1x128xf32> to vector<1x128xf32>
    %35 = vector.shape_cast %32 : vector<1x128xf32> to vector<1x1x128xf32>
    tpu.vector_store %arg6[%c0_27, %c5_28, %c0_29], %35 {strides = array<i32>} : memref<2x16x128xf32, #tpu.memory_space<vmem>>, vector<1x1x128xf32>,
    %c0_30 = arith.constant 0 : index
    %c6 = arith.constant 6 : index
    %36 = memref.load %arg1[%c0_30, %c6] : memref<2x16xi32, #tpu.memory_space<smem>>
    %37 = arith.index_cast %36 : i32 to index
    %c0_31 = arith.constant 0 : index
    %38 = vector.load %arg4[%37, %c0_31] : memref<64x128xf32, #tpu.memory_space<vmem>>, vector<1x128xf32>
    %c0_32 = arith.constant 0 : index
    %c6_33 = arith.constant 6 : index
    %c0_34 = arith.constant 0 : index
    %39 = vector.load %arg6[%c0_32, %c6_33, %c0_34] : memref<2x16x128xf32, #tpu.memory_space<vmem>>, vector<1x1x128xf32>
    %40 = vector.shape_cast %39 : vector<1x1x128xf32> to vector<1x128xf32>
    %41 = vector.shape_cast %38 : vector<1x128xf32> to vector<1x1x128xf32>
    tpu.vector_store %arg6[%c0_32, %c6_33, %c0_34], %41 {strides = array<i32>} : memref<2x16x128xf32, #tpu.memory_space<vmem>>, vector<1x1x128xf32>,
    %c0_35 = arith.constant 0 : index
    %c7 = arith.constant 7 : index
    %42 = memref.load %arg1[%c0_35, %c7] : memref<2x16xi32, #tpu.memory_space<smem>>
    %43 = arith.index_cast %42 : i32 to index
    %c0_36 = arith.constant 0 : index
    %44 = vector.load %arg4[%43, %c0_36] : memref<64x128xf32, #tpu.memory_space<vmem>>, vector<1x128xf32>
    %c0_37 = arith.constant 0 : index
    %c7_38 = arith.constant 7 : index
    %c0_39 = arith.constant 0 : index
    %45 = vector.load %arg6[%c0_37, %c7_38, %c0_39] : memref<2x16x128xf32, #tpu.memory_space<vmem>>, vector<1x1x128xf32>
    %46 = vector.shape_cast %45 : vector<1x1x128xf32> to vector<1x128xf32>
    %47 = vector.shape_cast %44 : vector<1x128xf32> to vector<1x1x128xf32>
    tpu.vector_store %arg6[%c0_37, %c7_38, %c0_39], %47 {strides = array<i32>} : memref<2x16x128xf32, #tpu.memory_space<vmem>>, vector<1x1x128xf32>,
    %c0_40 = arith.constant 0 : index
    %c8 = arith.constant 8 : index
    %48 = memref.load %arg1[%c0_40, %c8] : memref<2x16xi32, #tpu.memory_space<smem>>
    %49 = arith.index_cast %48 : i32 to index
    %c0_41 = arith.constant 0 : index
    %50 = vector.load %arg4[%49, %c0_41] : memref<64x128xf32, #tpu.memory_space<vmem>>, vector<1x128xf32>
    %c0_42 = arith.constant 0 : index
    %c8_43 = arith.constant 8 : index
    %c0_44 = arith.constant 0 : index
    %51 = vector.load %arg6[%c0_42, %c8_43, %c0_44] : memref<2x16x128xf32, #tpu.memory_space<vmem>>, vector<1x1x128xf32>
    %52 = vector.shape_cast %51 : vector<1x1x128xf32> to vector<1x128xf32>
    %53 = vector.shape_cast %50 : vector<1x128xf32> to vector<1x1x128xf32>
    tpu.vector_store %arg6[%c0_42, %c8_43, %c0_44], %53 {strides = array<i32>} : memref<2x16x128xf32, #tpu.memory_space<vmem>>, vector<1x1x128xf32>,
    %c0_45 = arith.constant 0 : index
    %c9 = arith.constant 9 : index
    %54 = memref.load %arg1[%c0_45, %c9] : memref<2x16xi32, #tpu.memory_space<smem>>
    %55 = arith.index_cast %54 : i32 to index
    %c0_46 = arith.constant 0 : index
    %56 = vector.load %arg4[%55, %c0_46] : memref<64x128xf32, #tpu.memory_space<vmem>>, vector<1x128xf32>
    %c0_47 = arith.constant 0 : index
    %c9_48 = arith.constant 9 : index
    %c0_49 = arith.constant 0 : index
    %57 = vector.load %arg6[%c0_47, %c9_48, %c0_49] : memref<2x16x128xf32, #tpu.memory_space<vmem>>, vector<1x1x128xf32>
    %58 = vector.shape_cast %57 : vector<1x1x128xf32> to vector<1x128xf32>
    %59 = vector.shape_cast %56 : vector<1x128xf32> to vector<1x1x128xf32>
    tpu.vector_store %arg6[%c0_47, %c9_48, %c0_49], %59 {strides = array<i32>} : memref<2x16x128xf32, #tpu.memory_space<vmem>>, vector<1x1x128xf32>,
    %c0_50 = arith.constant 0 : index
    %c10 = arith.constant 10 : index
    %60 = memref.load %arg1[%c0_50, %c10] : memref<2x16xi32, #tpu.memory_space<smem>>
    %61 = arith.index_cast %60 : i32 to index
    %c0_51 = arith.constant 0 : index
    %62 = vector.load %arg4[%61, %c0_51] : memref<64x128xf32, #tpu.memory_space<vmem>>, vector<1x128xf32>
    %c0_52 = arith.constant 0 : index
    %c10_53 = arith.constant 10 : index
    %c0_54 = arith.constant 0 : index
    %63 = vector.load %arg6[%c0_52, %c10_53, %c0_54] : memref<2x16x128xf32, #tpu.memory_space<vmem>>, vector<1x1x128xf32>
    %64 = vector.shape_cast %63 : vector<1x1x128xf32> to vector<1x128xf32>
    %65 = vector.shape_cast %62 : vector<1x128xf32> to vector<1x1x128xf32>
    tpu.vector_store %arg6[%c0_52, %c10_53, %c0_54], %65 {strides = array<i32>} : memref<2x16x128xf32, #tpu.memory_space<vmem>>, vector<1x1x128xf32>,
    %c0_55 = arith.constant 0 : index
    %c11 = arith.constant 11 : index
    %66 = memref.load %arg1[%c0_55, %c11] : memref<2x16xi32, #tpu.memory_space<smem>>
    %67 = arith.index_cast %66 : i32 to index
    %c0_56 = arith.constant 0 : index
    %68 = vector.load %arg4[%67, %c0_56] : memref<64x128xf32, #tpu.memory_space<vmem>>, vector<1x128xf32>
    %c0_57 = arith.constant 0 : index
    %c11_58 = arith.constant 11 : index
    %c0_59 = arith.constant 0 : index
    %69 = vector.load %arg6[%c0_57, %c11_58, %c0_59] : memref<2x16x128xf32, #tpu.memory_space<vmem>>, vector<1x1x128xf32>
    %70 = vector.shape_cast %69 : vector<1x1x128xf32> to vector<1x128xf32>
    %71 = vector.shape_cast %68 : vector<1x128xf32> to vector<1x1x128xf32>
    tpu.vector_store %arg6[%c0_57, %c11_58, %c0_59], %71 {strides = array<i32>} : memref<2x16x128xf32, #tpu.memory_space<vmem>>, vector<1x1x128xf32>,
    %c0_60 = arith.constant 0 : index
    %c12 = arith.constant 12 : index
    %72 = memref.load %arg1[%c0_60, %c12] : memref<2x16xi32, #tpu.memory_space<smem>>
    %73 = arith.index_cast %72 : i32 to index
    %c0_61 = arith.constant 0 : index
    %74 = vector.load %arg4[%73, %c0_61] : memref<64x128xf32, #tpu.memory_space<vmem>>, vector<1x128xf32>
    %c0_62 = arith.constant 0 : index
    %c12_63 = arith.constant 12 : index
    %c0_64 = arith.constant 0 : index
    %75 = vector.load %arg6[%c0_62, %c12_63, %c0_64] : memref<2x16x128xf32, #tpu.memory_space<vmem>>, vector<1x1x128xf32>
    %76 = vector.shape_cast %75 : vector<1x1x128xf32> to vector<1x128xf32>
    %77 = vector.shape_cast %74 : vector<1x128xf32> to vector<1x1x128xf32>
    tpu.vector_store %arg6[%c0_62, %c12_63, %c0_64], %77 {strides = array<i32>} : memref<2x16x128xf32, #tpu.memory_space<vmem>>, vector<1x1x128xf32>,
    %c0_65 = arith.constant 0 : index
    %c13 = arith.constant 13 : index
    %78 = memref.load %arg1[%c0_65, %c13] : memref<2x16xi32, #tpu.memory_space<smem>>
    %79 = arith.index_cast %78 : i32 to index
    %c0_66 = arith.constant 0 : index
    %80 = vector.load %arg4[%79, %c0_66] : memref<64x128xf32, #tpu.memory_space<vmem>>, vector<1x128xf32>
    %c0_67 = arith.constant 0 : index
    %c13_68 = arith.constant 13 : index
    %c0_69 = arith.constant 0 : index
    %81 = vector.load %arg6[%c0_67, %c13_68, %c0_69] : memref<2x16x128xf32, #tpu.memory_space<vmem>>, vector<1x1x128xf32>
    %82 = vector.shape_cast %81 : vector<1x1x128xf32> to vector<1x128xf32>
    %83 = vector.shape_cast %80 : vector<1x128xf32> to vector<1x1x128xf32>
    tpu.vector_store %arg6[%c0_67, %c13_68, %c0_69], %83 {strides = array<i32>} : memref<2x16x128xf32, #tpu.memory_space<vmem>>, vector<1x1x128xf32>,
    %c0_70 = arith.constant 0 : index
    %c14 = arith.constant 14 : index
    %84 = memref.load %arg1[%c0_70, %c14] : memref<2x16xi32, #tpu.memory_space<smem>>
    %85 = arith.index_cast %84 : i32 to index
    %c0_71 = arith.constant 0 : index
    %86 = vector.load %arg4[%85, %c0_71] : memref<64x128xf32, #tpu.memory_space<vmem>>, vector<1x128xf32>
    %c0_72 = arith.constant 0 : index
    %c14_73 = arith.constant 14 : index
    %c0_74 = arith.constant 0 : index
    %87 = vector.load %arg6[%c0_72, %c14_73, %c0_74] : memref<2x16x128xf32, #tpu.memory_space<vmem>>, vector<1x1x128xf32>
    %88 = vector.shape_cast %87 : vector<1x1x128xf32> to vector<1x128xf32>
    %89 = vector.shape_cast %86 : vector<1x128xf32> to vector<1x1x128xf32>
    tpu.vector_store %arg6[%c0_72, %c14_73, %c0_74], %89 {strides = array<i32>} : memref<2x16x128xf32, #tpu.memory_space<vmem>>, vector<1x1x128xf32>,
    %c0_75 = arith.constant 0 : index
    %c15 = arith.constant 15 : index
    %90 = memref.load %arg1[%c0_75, %c15] : memref<2x16xi32, #tpu.memory_space<smem>>
    %91 = arith.index_cast %90 : i32 to index
    %c0_76 = arith.constant 0 : index
    %92 = vector.load %arg4[%91, %c0_76] : memref<64x128xf32, #tpu.memory_space<vmem>>, vector<1x128xf32>
    %c0_77 = arith.constant 0 : index
    %c15_78 = arith.constant 15 : index
    %c0_79 = arith.constant 0 : index
    %93 = vector.load %arg6[%c0_77, %c15_78, %c0_79] : memref<2x16x128xf32, #tpu.memory_space<vmem>>, vector<1x1x128xf32>
    %94 = vector.shape_cast %93 : vector<1x1x128xf32> to vector<1x128xf32>
    %95 = vector.shape_cast %92 : vector<1x128xf32> to vector<1x1x128xf32>
    tpu.vector_store %arg6[%c0_77, %c15_78, %c0_79], %95 {strides = array<i32>} : memref<2x16x128xf32, #tpu.memory_space<vmem>>, vector<1x1x128xf32>,
    %c1_80 = arith.constant 1 : index
    %c0_81 = arith.constant 0 : index
    %96 = memref.load %arg1[%c1_80, %c0_81] : memref<2x16xi32, #tpu.memory_space<smem>>
    %97 = arith.index_cast %96 : i32 to index
    %c0_82 = arith.constant 0 : index
    %98 = vector.load %arg4[%97, %c0_82] : memref<64x128xf32, #tpu.memory_space<vmem>>, vector<1x128xf32>
    %c1_83 = arith.constant 1 : index
    %c0_84 = arith.constant 0 : index
    %c0_85 = arith.constant 0 : index
    %99 = vector.load %arg6[%c1_83, %c0_84, %c0_85] : memref<2x16x128xf32, #tpu.memory_space<vmem>>, vector<1x1x128xf32>
    %100 = vector.shape_cast %99 : vector<1x1x128xf32> to vector<1x128xf32>
    %101 = vector.shape_cast %98 : vector<1x128xf32> to vector<1x1x128xf32>
    tpu.vector_store %arg6[%c1_83, %c0_84, %c0_85], %101 {strides = array<i32>} : memref<2x16x128xf32, #tpu.memory_space<vmem>>, vector<1x1x128xf32>,
    %c1_86 = arith.constant 1 : index
    %c1_87 = arith.constant 1 : index
    %102 = memref.load %arg1[%c1_86, %c1_87] : memref<2x16xi32, #tpu.memory_space<smem>>
    %103 = arith.index_cast %102 : i32 to index
    %c0_88 = arith.constant 0 : index
    %104 = vector.load %arg4[%103, %c0_88] : memref<64x128xf32, #tpu.memory_space<vmem>>, vector<1x128xf32>
    %c1_89 = arith.constant 1 : index
    %c1_90 = arith.constant 1 : index
    %c0_91 = arith.constant 0 : index
    %105 = vector.load %arg6[%c1_89, %c1_90, %c0_91] : memref<2x16x128xf32, #tpu.memory_space<vmem>>, vector<1x1x128xf32>
    %106 = vector.shape_cast %105 : vector<1x1x128xf32> to vector<1x128xf32>
    %107 = vector.shape_cast %104 : vector<1x128xf32> to vector<1x1x128xf32>
    tpu.vector_store %arg6[%c1_89, %c1_90, %c0_91], %107 {strides = array<i32>} : memref<2x16x128xf32, #tpu.memory_space<vmem>>, vector<1x1x128xf32>,
    %c1_92 = arith.constant 1 : index
    %c2_93 = arith.constant 2 : index
    %108 = memref.load %arg1[%c1_92, %c2_93] : memref<2x16xi32, #tpu.memory_space<smem>>
    %109 = arith.index_cast %108 : i32 to index
    %c0_94 = arith.constant 0 : index
    %110 = vector.load %arg4[%109, %c0_94] : memref<64x128xf32, #tpu.memory_space<vmem>>, vector<1x128xf32>
    %c1_95 = arith.constant 1 : index
    %c2_96 = arith.constant 2 : index
    %c0_97 = arith.constant 0 : index
    %111 = vector.load %arg6[%c1_95, %c2_96, %c0_97] : memref<2x16x128xf32, #tpu.memory_space<vmem>>, vector<1x1x128xf32>
    %112 = vector.shape_cast %111 : vector<1x1x128xf32> to vector<1x128xf32>
    %113 = vector.shape_cast %110 : vector<1x128xf32> to vector<1x1x128xf32>
    tpu.vector_store %arg6[%c1_95, %c2_96, %c0_97], %113 {strides = array<i32>} : memref<2x16x128xf32, #tpu.memory_space<vmem>>, vector<1x1x128xf32>,
    %c1_98 = arith.constant 1 : index
    %c3_99 = arith.constant 3 : index
    %114 = memref.load %arg1[%c1_98, %c3_99] : memref<2x16xi32, #tpu.memory_space<smem>>
    %115 = arith.index_cast %114 : i32 to index
    %c0_100 = arith.constant 0 : index
    %116 = vector.load %arg4[%115, %c0_100] : memref<64x128xf32, #tpu.memory_space<vmem>>, vector<1x128xf32>
    %c1_101 = arith.constant 1 : index
    %c3_102 = arith.constant 3 : index
    %c0_103 = arith.constant 0 : index
    %117 = vector.load %arg6[%c1_101, %c3_102, %c0_103] : memref<2x16x128xf32, #tpu.memory_space<vmem>>, vector<1x1x128xf32>
    %118 = vector.shape_cast %117 : vector<1x1x128xf32> to vector<1x128xf32>
    %119 = vector.shape_cast %116 : vector<1x128xf32> to vector<1x1x128xf32>
    tpu.vector_store %arg6[%c1_101, %c3_102, %c0_103], %119 {strides = array<i32>} : memref<2x16x128xf32, #tpu.memory_space<vmem>>, vector<1x1x128xf32>,
    %c1_104 = arith.constant 1 : index
    %c4_105 = arith.constant 4 : index
    %120 = memref.load %arg1[%c1_104, %c4_105] : memref<2x16xi32, #tpu.memory_space<smem>>
    %121 = arith.index_cast %120 : i32 to index
    %c0_106 = arith.constant 0 : index
    %122 = vector.load %arg4[%121, %c0_106] : memref<64x128xf32, #tpu.memory_space<vmem>>, vector<1x128xf32>
    %c1_107 = arith.constant 1 : index
    %c4_108 = arith.constant 4 : index
    %c0_109 = arith.constant 0 : index
    %123 = vector.load %arg6[%c1_107, %c4_108, %c0_109] : memref<2x16x128xf32, #tpu.memory_space<vmem>>, vector<1x1x128xf32>
    %124 = vector.shape_cast %123 : vector<1x1x128xf32> to vector<1x128xf32>
    %125 = vector.shape_cast %122 : vector<1x128xf32> to vector<1x1x128xf32>
    tpu.vector_store %arg6[%c1_107, %c4_108, %c0_109], %125 {strides = array<i32>} : memref<2x16x128xf32, #tpu.memory_space<vmem>>, vector<1x1x128xf32>,
    %c1_110 = arith.constant 1 : index
    %c5_111 = arith.constant 5 : index
    %126 = memref.load %arg1[%c1_110, %c5_111] : memref<2x16xi32, #tpu.memory_space<smem>>
    %127 = arith.index_cast %126 : i32 to index
    %c0_112 = arith.constant 0 : index
    %128 = vector.load %arg4[%127, %c0_112] : memref<64x128xf32, #tpu.memory_space<vmem>>, vector<1x128xf32>
    %c1_113 = arith.constant 1 : index
    %c5_114 = arith.constant 5 : index
    %c0_115 = arith.constant 0 : index
    %129 = vector.load %arg6[%c1_113, %c5_114, %c0_115] : memref<2x16x128xf32, #tpu.memory_space<vmem>>, vector<1x1x128xf32>
    %130 = vector.shape_cast %129 : vector<1x1x128xf32> to vector<1x128xf32>
    %131 = vector.shape_cast %128 : vector<1x128xf32> to vector<1x1x128xf32>
    tpu.vector_store %arg6[%c1_113, %c5_114, %c0_115], %131 {strides = array<i32>} : memref<2x16x128xf32, #tpu.memory_space<vmem>>, vector<1x1x128xf32>,
    %c1_116 = arith.constant 1 : index
    %c6_117 = arith.constant 6 : index
    %132 = memref.load %arg1[%c1_116, %c6_117] : memref<2x16xi32, #tpu.memory_space<smem>>
    %133 = arith.index_cast %132 : i32 to index
    %c0_118 = arith.constant 0 : index
    %134 = vector.load %arg4[%133, %c0_118] : memref<64x128xf32, #tpu.memory_space<vmem>>, vector<1x128xf32>
    %c1_119 = arith.constant 1 : index
    %c6_120 = arith.constant 6 : index
    %c0_121 = arith.constant 0 : index
    %135 = vector.load %arg6[%c1_119, %c6_120, %c0_121] : memref<2x16x128xf32, #tpu.memory_space<vmem>>, vector<1x1x128xf32>
    %136 = vector.shape_cast %135 : vector<1x1x128xf32> to vector<1x128xf32>
    %137 = vector.shape_cast %134 : vector<1x128xf32> to vector<1x1x128xf32>
    tpu.vector_store %arg6[%c1_119, %c6_120, %c0_121], %137 {strides = array<i32>} : memref<2x16x128xf32, #tpu.memory_space<vmem>>, vector<1x1x128xf32>,
    %c1_122 = arith.constant 1 : index
    %c7_123 = arith.constant 7 : index
    %138 = memref.load %arg1[%c1_122, %c7_123] : memref<2x16xi32, #tpu.memory_space<smem>>
    %139 = arith.index_cast %138 : i32 to index
    %c0_124 = arith.constant 0 : index
    %140 = vector.load %arg4[%139, %c0_124] : memref<64x128xf32, #tpu.memory_space<vmem>>, vector<1x128xf32>
    %c1_125 = arith.constant 1 : index
    %c7_126 = arith.constant 7 : index
    %c0_127 = arith.constant 0 : index
    %141 = vector.load %arg6[%c1_125, %c7_126, %c0_127] : memref<2x16x128xf32, #tpu.memory_space<vmem>>, vector<1x1x128xf32>
    %142 = vector.shape_cast %141 : vector<1x1x128xf32> to vector<1x128xf32>
    %143 = vector.shape_cast %140 : vector<1x128xf32> to vector<1x1x128xf32>
    tpu.vector_store %arg6[%c1_125, %c7_126, %c0_127], %143 {strides = array<i32>} : memref<2x16x128xf32, #tpu.memory_space<vmem>>, vector<1x1x128xf32>,
    %c1_128 = arith.constant 1 : index
    %c8_129 = arith.constant 8 : index
    %144 = memref.load %arg1[%c1_128, %c8_129] : memref<2x16xi32, #tpu.memory_space<smem>>
    %145 = arith.index_cast %144 : i32 to index
    %c0_130 = arith.constant 0 : index
    %146 = vector.load %arg4[%145, %c0_130] : memref<64x128xf32, #tpu.memory_space<vmem>>, vector<1x128xf32>
    %c1_131 = arith.constant 1 : index
    %c8_132 = arith.constant 8 : index
    %c0_133 = arith.constant 0 : index
    %147 = vector.load %arg6[%c1_131, %c8_132, %c0_133] : memref<2x16x128xf32, #tpu.memory_space<vmem>>, vector<1x1x128xf32>
    %148 = vector.shape_cast %147 : vector<1x1x128xf32> to vector<1x128xf32>
    %149 = vector.shape_cast %146 : vector<1x128xf32> to vector<1x1x128xf32>
    tpu.vector_store %arg6[%c1_131, %c8_132, %c0_133], %149 {strides = array<i32>} : memref<2x16x128xf32, #tpu.memory_space<vmem>>, vector<1x1x128xf32>,
    %c1_134 = arith.constant 1 : index
    %c9_135 = arith.constant 9 : index
    %150 = memref.load %arg1[%c1_134, %c9_135] : memref<2x16xi32, #tpu.memory_space<smem>>
    %151 = arith.index_cast %150 : i32 to index
    %c0_136 = arith.constant 0 : index
    %152 = vector.load %arg4[%151, %c0_136] : memref<64x128xf32, #tpu.memory_space<vmem>>, vector<1x128xf32>
    %c1_137 = arith.constant 1 : index
    %c9_138 = arith.constant 9 : index
    %c0_139 = arith.constant 0 : index
    %153 = vector.load %arg6[%c1_137, %c9_138, %c0_139] : memref<2x16x128xf32, #tpu.memory_space<vmem>>, vector<1x1x128xf32>
    %154 = vector.shape_cast %153 : vector<1x1x128xf32> to vector<1x128xf32>
    %155 = vector.shape_cast %152 : vector<1x128xf32> to vector<1x1x128xf32>
    tpu.vector_store %arg6[%c1_137, %c9_138, %c0_139], %155 {strides = array<i32>} : memref<2x16x128xf32, #tpu.memory_space<vmem>>, vector<1x1x128xf32>,
    %c1_140 = arith.constant 1 : index
    %c10_141 = arith.constant 10 : index
    %156 = memref.load %arg1[%c1_140, %c10_141] : memref<2x16xi32, #tpu.memory_space<smem>>
    %157 = arith.index_cast %156 : i32 to index
    %c0_142 = arith.constant 0 : index
    %158 = vector.load %arg4[%157, %c0_142] : memref<64x128xf32, #tpu.memory_space<vmem>>, vector<1x128xf32>
    %c1_143 = arith.constant 1 : index
    %c10_144 = arith.constant 10 : index
    %c0_145 = arith.constant 0 : index
    %159 = vector.load %arg6[%c1_143, %c10_144, %c0_145] : memref<2x16x128xf32, #tpu.memory_space<vmem>>, vector<1x1x128xf32>
    %160 = vector.shape_cast %159 : vector<1x1x128xf32> to vector<1x128xf32>
    %161 = vector.shape_cast %158 : vector<1x128xf32> to vector<1x1x128xf32>
    tpu.vector_store %arg6[%c1_143, %c10_144, %c0_145], %161 {strides = array<i32>} : memref<2x16x128xf32, #tpu.memory_space<vmem>>, vector<1x1x128xf32>,
    %c1_146 = arith.constant 1 : index
    %c11_147 = arith.constant 11 : index
    %162 = memref.load %arg1[%c1_146, %c11_147] : memref<2x16xi32, #tpu.memory_space<smem>>
    %163 = arith.index_cast %162 : i32 to index
    %c0_148 = arith.constant 0 : index
    %164 = vector.load %arg4[%163, %c0_148] : memref<64x128xf32, #tpu.memory_space<vmem>>, vector<1x128xf32>
    %c1_149 = arith.constant 1 : index
    %c11_150 = arith.constant 11 : index
    %c0_151 = arith.constant 0 : index
    %165 = vector.load %arg6[%c1_149, %c11_150, %c0_151] : memref<2x16x128xf32, #tpu.memory_space<vmem>>, vector<1x1x128xf32>
    %166 = vector.shape_cast %165 : vector<1x1x128xf32> to vector<1x128xf32>
    %167 = vector.shape_cast %164 : vector<1x128xf32> to vector<1x1x128xf32>
    tpu.vector_store %arg6[%c1_149, %c11_150, %c0_151], %167 {strides = array<i32>} : memref<2x16x128xf32, #tpu.memory_space<vmem>>, vector<1x1x128xf32>,
    %c1_152 = arith.constant 1 : index
    %c12_153 = arith.constant 12 : index
    %168 = memref.load %arg1[%c1_152, %c12_153] : memref<2x16xi32, #tpu.memory_space<smem>>
    %169 = arith.index_cast %168 : i32 to index
    %c0_154 = arith.constant 0 : index
    %170 = vector.load %arg4[%169, %c0_154] : memref<64x128xf32, #tpu.memory_space<vmem>>, vector<1x128xf32>
    %c1_155 = arith.constant 1 : index
    %c12_156 = arith.constant 12 : index
    %c0_157 = arith.constant 0 : index
    %171 = vector.load %arg6[%c1_155, %c12_156, %c0_157] : memref<2x16x128xf32, #tpu.memory_space<vmem>>, vector<1x1x128xf32>
    %172 = vector.shape_cast %171 : vector<1x1x128xf32> to vector<1x128xf32>
    %173 = vector.shape_cast %170 : vector<1x128xf32> to vector<1x1x128xf32>
    tpu.vector_store %arg6[%c1_155, %c12_156, %c0_157], %173 {strides = array<i32>} : memref<2x16x128xf32, #tpu.memory_space<vmem>>, vector<1x1x128xf32>,
    %c1_158 = arith.constant 1 : index
    %c13_159 = arith.constant 13 : index
    %174 = memref.load %arg1[%c1_158, %c13_159] : memref<2x16xi32, #tpu.memory_space<smem>>
    %175 = arith.index_cast %174 : i32 to index
    %c0_160 = arith.constant 0 : index
    %176 = vector.load %arg4[%175, %c0_160] : memref<64x128xf32, #tpu.memory_space<vmem>>, vector<1x128xf32>
    %c1_161 = arith.constant 1 : index
    %c13_162 = arith.constant 13 : index
    %c0_163 = arith.constant 0 : index
    %177 = vector.load %arg6[%c1_161, %c13_162, %c0_163] : memref<2x16x128xf32, #tpu.memory_space<vmem>>, vector<1x1x128xf32>
    %178 = vector.shape_cast %177 : vector<1x1x128xf32> to vector<1x128xf32>
    %179 = vector.shape_cast %176 : vector<1x128xf32> to vector<1x1x128xf32>
    tpu.vector_store %arg6[%c1_161, %c13_162, %c0_163], %179 {strides = array<i32>} : memref<2x16x128xf32, #tpu.memory_space<vmem>>, vector<1x1x128xf32>,
    %c1_164 = arith.constant 1 : index
    %c14_165 = arith.constant 14 : index
    %180 = memref.load %arg1[%c1_164, %c14_165] : memref<2x16xi32, #tpu.memory_space<smem>>
    %181 = arith.index_cast %180 : i32 to index
    %c0_166 = arith.constant 0 : index
    %182 = vector.load %arg4[%181, %c0_166] : memref<64x128xf32, #tpu.memory_space<vmem>>, vector<1x128xf32>
    %c1_167 = arith.constant 1 : index
    %c14_168 = arith.constant 14 : index
    %c0_169 = arith.constant 0 : index
    %183 = vector.load %arg6[%c1_167, %c14_168, %c0_169] : memref<2x16x128xf32, #tpu.memory_space<vmem>>, vector<1x1x128xf32>
    %184 = vector.shape_cast %183 : vector<1x1x128xf32> to vector<1x128xf32>
    %185 = vector.shape_cast %182 : vector<1x128xf32> to vector<1x1x128xf32>
    tpu.vector_store %arg6[%c1_167, %c14_168, %c0_169], %185 {strides = array<i32>} : memref<2x16x128xf32, #tpu.memory_space<vmem>>, vector<1x1x128xf32>,
    %c1_170 = arith.constant 1 : index
    %c15_171 = arith.constant 15 : index
    %186 = memref.load %arg1[%c1_170, %c15_171] : memref<2x16xi32, #tpu.memory_space<smem>>
    %187 = arith.index_cast %186 : i32 to index
    %c0_172 = arith.constant 0 : index
    %188 = vector.load %arg4[%187, %c0_172] : memref<64x128xf32, #tpu.memory_space<vmem>>, vector<1x128xf32>
    %c1_173 = arith.constant 1 : index
    %c15_174 = arith.constant 15 : index
    %c0_175 = arith.constant 0 : index
    %189 = vector.load %arg6[%c1_173, %c15_174, %c0_175] : memref<2x16x128xf32, #tpu.memory_space<vmem>>, vector<1x1x128xf32>
    %190 = vector.shape_cast %189 : vector<1x1x128xf32> to vector<1x128xf32>
    %191 = vector.shape_cast %188 : vector<1x128xf32> to vector<1x1x128xf32>
    tpu.vector_store %arg6[%c1_173, %c15_174, %c0_175], %191 {strides = array<i32>} : memref<2x16x128xf32, #tpu.memory_space<vmem>>, vector<1x1x128xf32>,
    %c0_176 = arith.constant 0 : index
    %192 = memref.load %arg2[%c0_176] : memref<2xi32, #tpu.memory_space<smem>>
    %c1_177 = arith.constant 1 : index
    %193 = memref.load %arg2[%c1_177] : memref<2xi32, #tpu.memory_space<smem>>
    %c16_i32 = arith.constant 16 : i32
    %194 = arith.subi %c16_i32, %192 : i32
    %c1_i32 = arith.constant 1 : i32
    %195 = arith.subi %194, %c1_i32 : i32
    %c0_178 = arith.constant 0 : index
    %196 = memref.load %arg3[%c0_178] : memref<2xi32, #tpu.memory_space<smem>>
    %197 = arith.minsi %195, %196 : i32
    %c16_i32_179 = arith.constant 16 : i32
    %198 = arith.subi %c16_i32_179, %193 : i32
    %c1_i32_180 = arith.constant 1 : i32
    %199 = arith.subi %198, %c1_i32_180 : i32
    %c1_181 = arith.constant 1 : index
    %200 = memref.load %arg3[%c1_181] : memref<2xi32, #tpu.memory_space<smem>>
    %201 = arith.minsi %199, %200 : i32
    %c0_i32 = arith.constant 0 : i32
    %202 = arith.cmpi sgt, %197, %c0_i32 : i32
    %203 = arith.extui %202 : i1 to i32
    %c0_i32_182 = arith.constant 0 : i32
    %204 = arith.cmpi ne, %203, %c0_i32_182 : i32
    scf.if %204 {
      %c0_207 = arith.constant 0 : index
      %c0_208 = arith.constant 0 : index
      %c0_209 = arith.constant 0 : index
      %250 = vector.load %arg5[%c0_207, %c0_208, %c0_209] : memref<2x8x128xf32, #tpu.memory_space<vmem>>, vector<1x1x128xf32>
      %251 = vector.shape_cast %250 : vector<1x1x128xf32> to vector<1x128xf32>
      %c1_i32_210 = arith.constant 1 : i32
      %252 = arith.addi %192, %c1_i32_210 : i32
      %c0_i32_211 = arith.constant 0 : i32
      %253 = arith.addi %252, %c0_i32_211 : i32
      %c0_212 = arith.constant 0 : index
      %254 = arith.index_cast %253 : i32 to index
      %c0_213 = arith.constant 0 : index
      %255 = vector.load %arg6[%c0_212, %254, %c0_213] : memref<2x16x128xf32, #tpu.memory_space<vmem>>, vector<1x1x128xf32>
      %256 = vector.shape_cast %255 : vector<1x1x128xf32> to vector<1x128xf32>
      %257 = vector.shape_cast %251 : vector<1x128xf32> to vector<1x1x128xf32>
      tpu.vector_store %arg6[%c0_212, %254, %c0_213], %257 {strides = array<i32>} : memref<2x16x128xf32, #tpu.memory_space<vmem>>, vector<1x1x128xf32>,
    } else {
    }
    %c1_i32_183 = arith.constant 1 : i32
    %205 = arith.cmpi sgt, %197, %c1_i32_183 : i32
    %206 = arith.extui %205 : i1 to i32
    %c0_i32_184 = arith.constant 0 : i32
    %207 = arith.cmpi ne, %206, %c0_i32_184 : i32
    scf.if %207 {
      %c0_207 = arith.constant 0 : index
      %c1_208 = arith.constant 1 : index
      %c0_209 = arith.constant 0 : index
      %250 = vector.load %arg5[%c0_207, %c1_208, %c0_209] : memref<2x8x128xf32, #tpu.memory_space<vmem>>, vector<1x1x128xf32>
      %251 = vector.shape_cast %250 : vector<1x1x128xf32> to vector<1x128xf32>
      %c1_i32_210 = arith.constant 1 : i32
      %252 = arith.addi %192, %c1_i32_210 : i32
      %c1_i32_211 = arith.constant 1 : i32
      %253 = arith.addi %252, %c1_i32_211 : i32
      %c0_212 = arith.constant 0 : index
      %254 = arith.index_cast %253 : i32 to index
      %c0_213 = arith.constant 0 : index
      %255 = vector.load %arg6[%c0_212, %254, %c0_213] : memref<2x16x128xf32, #tpu.memory_space<vmem>>, vector<1x1x128xf32>
      %256 = vector.shape_cast %255 : vector<1x1x128xf32> to vector<1x128xf32>
      %257 = vector.shape_cast %251 : vector<1x128xf32> to vector<1x1x128xf32>
      tpu.vector_store %arg6[%c0_212, %254, %c0_213], %257 {strides = array<i32>} : memref<2x16x128xf32, #tpu.memory_space<vmem>>, vector<1x1x128xf32>,
    } else {
    }
    %c2_i32 = arith.constant 2 : i32
    %208 = arith.cmpi sgt, %197, %c2_i32 : i32
    %209 = arith.extui %208 : i1 to i32
    %c0_i32_185 = arith.constant 0 : i32
    %210 = arith.cmpi ne, %209, %c0_i32_185 : i32
    scf.if %210 {
      %c0_207 = arith.constant 0 : index
      %c2_208 = arith.constant 2 : index
      %c0_209 = arith.constant 0 : index
      %250 = vector.load %arg5[%c0_207, %c2_208, %c0_209] : memref<2x8x128xf32, #tpu.memory_space<vmem>>, vector<1x1x128xf32>
      %251 = vector.shape_cast %250 : vector<1x1x128xf32> to vector<1x128xf32>
      %c1_i32_210 = arith.constant 1 : i32
      %252 = arith.addi %192, %c1_i32_210 : i32
      %c2_i32_211 = arith.constant 2 : i32
      %253 = arith.addi %252, %c2_i32_211 : i32
      %c0_212 = arith.constant 0 : index
      %254 = arith.index_cast %253 : i32 to index
      %c0_213 = arith.constant 0 : index
      %255 = vector.load %arg6[%c0_212, %254, %c0_213] : memref<2x16x128xf32, #tpu.memory_space<vmem>>, vector<1x1x128xf32>
      %256 = vector.shape_cast %255 : vector<1x1x128xf32> to vector<1x128xf32>
      %257 = vector.shape_cast %251 : vector<1x128xf32> to vector<1x1x128xf32>
      tpu.vector_store %arg6[%c0_212, %254, %c0_213], %257 {strides = array<i32>} : memref<2x16x128xf32, #tpu.memory_space<vmem>>, vector<1x1x128xf32>,
    } else {
    }
    %c3_i32 = arith.constant 3 : i32
    %211 = arith.cmpi sgt, %197, %c3_i32 : i32
    %212 = arith.extui %211 : i1 to i32
    %c0_i32_186 = arith.constant 0 : i32
    %213 = arith.cmpi ne, %212, %c0_i32_186 : i32
    scf.if %213 {
      %c0_207 = arith.constant 0 : index
      %c3_208 = arith.constant 3 : index
      %c0_209 = arith.constant 0 : index
      %250 = vector.load %arg5[%c0_207, %c3_208, %c0_209] : memref<2x8x128xf32, #tpu.memory_space<vmem>>, vector<1x1x128xf32>
      %251 = vector.shape_cast %250 : vector<1x1x128xf32> to vector<1x128xf32>
      %c1_i32_210 = arith.constant 1 : i32
      %252 = arith.addi %192, %c1_i32_210 : i32
      %c3_i32_211 = arith.constant 3 : i32
      %253 = arith.addi %252, %c3_i32_211 : i32
      %c0_212 = arith.constant 0 : index
      %254 = arith.index_cast %253 : i32 to index
      %c0_213 = arith.constant 0 : index
      %255 = vector.load %arg6[%c0_212, %254, %c0_213] : memref<2x16x128xf32, #tpu.memory_space<vmem>>, vector<1x1x128xf32>
      %256 = vector.shape_cast %255 : vector<1x1x128xf32> to vector<1x128xf32>
      %257 = vector.shape_cast %251 : vector<1x128xf32> to vector<1x1x128xf32>
      tpu.vector_store %arg6[%c0_212, %254, %c0_213], %257 {strides = array<i32>} : memref<2x16x128xf32, #tpu.memory_space<vmem>>, vector<1x1x128xf32>,
    } else {
    }
    %c4_i32 = arith.constant 4 : i32
    %214 = arith.cmpi sgt, %197, %c4_i32 : i32
    %215 = arith.extui %214 : i1 to i32
    %c0_i32_187 = arith.constant 0 : i32
    %216 = arith.cmpi ne, %215, %c0_i32_187 : i32
    scf.if %216 {
      %c0_207 = arith.constant 0 : index
      %c4_208 = arith.constant 4 : index
      %c0_209 = arith.constant 0 : index
      %250 = vector.load %arg5[%c0_207, %c4_208, %c0_209] : memref<2x8x128xf32, #tpu.memory_space<vmem>>, vector<1x1x128xf32>
      %251 = vector.shape_cast %250 : vector<1x1x128xf32> to vector<1x128xf32>
      %c1_i32_210 = arith.constant 1 : i32
      %252 = arith.addi %192, %c1_i32_210 : i32
      %c4_i32_211 = arith.constant 4 : i32
      %253 = arith.addi %252, %c4_i32_211 : i32
      %c0_212 = arith.constant 0 : index
      %254 = arith.index_cast %253 : i32 to index
      %c0_213 = arith.constant 0 : index
      %255 = vector.load %arg6[%c0_212, %254, %c0_213] : memref<2x16x128xf32, #tpu.memory_space<vmem>>, vector<1x1x128xf32>
      %256 = vector.shape_cast %255 : vector<1x1x128xf32> to vector<1x128xf32>
      %257 = vector.shape_cast %251 : vector<1x128xf32> to vector<1x1x128xf32>
      tpu.vector_store %arg6[%c0_212, %254, %c0_213], %257 {strides = array<i32>} : memref<2x16x128xf32, #tpu.memory_space<vmem>>, vector<1x1x128xf32>,
    } else {
    }
    %c5_i32 = arith.constant 5 : i32
    %217 = arith.cmpi sgt, %197, %c5_i32 : i32
    %218 = arith.extui %217 : i1 to i32
    %c0_i32_188 = arith.constant 0 : i32
    %219 = arith.cmpi ne, %218, %c0_i32_188 : i32
    scf.if %219 {
      %c0_207 = arith.constant 0 : index
      %c5_208 = arith.constant 5 : index
      %c0_209 = arith.constant 0 : index
      %250 = vector.load %arg5[%c0_207, %c5_208, %c0_209] : memref<2x8x128xf32, #tpu.memory_space<vmem>>, vector<1x1x128xf32>
      %251 = vector.shape_cast %250 : vector<1x1x128xf32> to vector<1x128xf32>
      %c1_i32_210 = arith.constant 1 : i32
      %252 = arith.addi %192, %c1_i32_210 : i32
      %c5_i32_211 = arith.constant 5 : i32
      %253 = arith.addi %252, %c5_i32_211 : i32
      %c0_212 = arith.constant 0 : index
      %254 = arith.index_cast %253 : i32 to index
      %c0_213 = arith.constant 0 : index
      %255 = vector.load %arg6[%c0_212, %254, %c0_213] : memref<2x16x128xf32, #tpu.memory_space<vmem>>, vector<1x1x128xf32>
      %256 = vector.shape_cast %255 : vector<1x1x128xf32> to vector<1x128xf32>
      %257 = vector.shape_cast %251 : vector<1x128xf32> to vector<1x1x128xf32>
      tpu.vector_store %arg6[%c0_212, %254, %c0_213], %257 {strides = array<i32>} : memref<2x16x128xf32, #tpu.memory_space<vmem>>, vector<1x1x128xf32>,
    } else {
    }
    %c6_i32 = arith.constant 6 : i32
    %220 = arith.cmpi sgt, %197, %c6_i32 : i32
    %221 = arith.extui %220 : i1 to i32
    %c0_i32_189 = arith.constant 0 : i32
    %222 = arith.cmpi ne, %221, %c0_i32_189 : i32
    scf.if %222 {
      %c0_207 = arith.constant 0 : index
      %c6_208 = arith.constant 6 : index
      %c0_209 = arith.constant 0 : index
      %250 = vector.load %arg5[%c0_207, %c6_208, %c0_209] : memref<2x8x128xf32, #tpu.memory_space<vmem>>, vector<1x1x128xf32>
      %251 = vector.shape_cast %250 : vector<1x1x128xf32> to vector<1x128xf32>
      %c1_i32_210 = arith.constant 1 : i32
      %252 = arith.addi %192, %c1_i32_210 : i32
      %c6_i32_211 = arith.constant 6 : i32
      %253 = arith.addi %252, %c6_i32_211 : i32
      %c0_212 = arith.constant 0 : index
      %254 = arith.index_cast %253 : i32 to index
      %c0_213 = arith.constant 0 : index
      %255 = vector.load %arg6[%c0_212, %254, %c0_213] : memref<2x16x128xf32, #tpu.memory_space<vmem>>, vector<1x1x128xf32>
      %256 = vector.shape_cast %255 : vector<1x1x128xf32> to vector<1x128xf32>
      %257 = vector.shape_cast %251 : vector<1x128xf32> to vector<1x1x128xf32>
      tpu.vector_store %arg6[%c0_212, %254, %c0_213], %257 {strides = array<i32>} : memref<2x16x128xf32, #tpu.memory_space<vmem>>, vector<1x1x128xf32>,
    } else {
    }
    %c7_i32 = arith.constant 7 : i32
    %223 = arith.cmpi sgt, %197, %c7_i32 : i32
    %224 = arith.extui %223 : i1 to i32
    %c0_i32_190 = arith.constant 0 : i32
    %225 = arith.cmpi ne, %224, %c0_i32_190 : i32
    scf.if %225 {
      %c0_207 = arith.constant 0 : index
      %c7_208 = arith.constant 7 : index
      %c0_209 = arith.constant 0 : index
      %250 = vector.load %arg5[%c0_207, %c7_208, %c0_209] : memref<2x8x128xf32, #tpu.memory_space<vmem>>, vector<1x1x128xf32>
      %251 = vector.shape_cast %250 : vector<1x1x128xf32> to vector<1x128xf32>
      %c1_i32_210 = arith.constant 1 : i32
      %252 = arith.addi %192, %c1_i32_210 : i32
      %c7_i32_211 = arith.constant 7 : i32
      %253 = arith.addi %252, %c7_i32_211 : i32
      %c0_212 = arith.constant 0 : index
      %254 = arith.index_cast %253 : i32 to index
      %c0_213 = arith.constant 0 : index
      %255 = vector.load %arg6[%c0_212, %254, %c0_213] : memref<2x16x128xf32, #tpu.memory_space<vmem>>, vector<1x1x128xf32>
      %256 = vector.shape_cast %255 : vector<1x1x128xf32> to vector<1x128xf32>
      %257 = vector.shape_cast %251 : vector<1x128xf32> to vector<1x1x128xf32>
      tpu.vector_store %arg6[%c0_212, %254, %c0_213], %257 {strides = array<i32>} : memref<2x16x128xf32, #tpu.memory_space<vmem>>, vector<1x1x128xf32>,
    } else {
    }
    %c0_i32_191 = arith.constant 0 : i32
    %226 = arith.cmpi sgt, %201, %c0_i32_191 : i32
    %227 = arith.extui %226 : i1 to i32
    %c0_i32_192 = arith.constant 0 : i32
    %228 = arith.cmpi ne, %227, %c0_i32_192 : i32
    scf.if %228 {
      %c1_207 = arith.constant 1 : index
      %c0_208 = arith.constant 0 : index
      %c0_209 = arith.constant 0 : index
      %250 = vector.load %arg5[%c1_207, %c0_208, %c0_209] : memref<2x8x128xf32, #tpu.memory_space<vmem>>, vector<1x1x128xf32>
      %251 = vector.shape_cast %250 : vector<1x1x128xf32> to vector<1x128xf32>
      %c1_i32_210 = arith.constant 1 : i32
      %252 = arith.addi %193, %c1_i32_210 : i32
      %c0_i32_211 = arith.constant 0 : i32
      %253 = arith.addi %252, %c0_i32_211 : i32
      %c1_212 = arith.constant 1 : index
      %254 = arith.index_cast %253 : i32 to index
      %c0_213 = arith.constant 0 : index
      %255 = vector.load %arg6[%c1_212, %254, %c0_213] : memref<2x16x128xf32, #tpu.memory_space<vmem>>, vector<1x1x128xf32>
      %256 = vector.shape_cast %255 : vector<1x1x128xf32> to vector<1x128xf32>
      %257 = vector.shape_cast %251 : vector<1x128xf32> to vector<1x1x128xf32>
      tpu.vector_store %arg6[%c1_212, %254, %c0_213], %257 {strides = array<i32>} : memref<2x16x128xf32, #tpu.memory_space<vmem>>, vector<1x1x128xf32>,
    } else {
    }
    %c1_i32_193 = arith.constant 1 : i32
    %229 = arith.cmpi sgt, %201, %c1_i32_193 : i32
    %230 = arith.extui %229 : i1 to i32
    %c0_i32_194 = arith.constant 0 : i32
    %231 = arith.cmpi ne, %230, %c0_i32_194 : i32
    scf.if %231 {
      %c1_207 = arith.constant 1 : index
      %c1_208 = arith.constant 1 : index
      %c0_209 = arith.constant 0 : index
      %250 = vector.load %arg5[%c1_207, %c1_208, %c0_209] : memref<2x8x128xf32, #tpu.memory_space<vmem>>, vector<1x1x128xf32>
      %251 = vector.shape_cast %250 : vector<1x1x128xf32> to vector<1x128xf32>
      %c1_i32_210 = arith.constant 1 : i32
      %252 = arith.addi %193, %c1_i32_210 : i32
      %c1_i32_211 = arith.constant 1 : i32
      %253 = arith.addi %252, %c1_i32_211 : i32
      %c1_212 = arith.constant 1 : index
      %254 = arith.index_cast %253 : i32 to index
      %c0_213 = arith.constant 0 : index
      %255 = vector.load %arg6[%c1_212, %254, %c0_213] : memref<2x16x128xf32, #tpu.memory_space<vmem>>, vector<1x1x128xf32>
      %256 = vector.shape_cast %255 : vector<1x1x128xf32> to vector<1x128xf32>
      %257 = vector.shape_cast %251 : vector<1x128xf32> to vector<1x1x128xf32>
      tpu.vector_store %arg6[%c1_212, %254, %c0_213], %257 {strides = array<i32>} : memref<2x16x128xf32, #tpu.memory_space<vmem>>, vector<1x1x128xf32>,
    } else {
    }
    %c2_i32_195 = arith.constant 2 : i32
    %232 = arith.cmpi sgt, %201, %c2_i32_195 : i32
    %233 = arith.extui %232 : i1 to i32
    %c0_i32_196 = arith.constant 0 : i32
    %234 = arith.cmpi ne, %233, %c0_i32_196 : i32
    scf.if %234 {
      %c1_207 = arith.constant 1 : index
      %c2_208 = arith.constant 2 : index
      %c0_209 = arith.constant 0 : index
      %250 = vector.load %arg5[%c1_207, %c2_208, %c0_209] : memref<2x8x128xf32, #tpu.memory_space<vmem>>, vector<1x1x128xf32>
      %251 = vector.shape_cast %250 : vector<1x1x128xf32> to vector<1x128xf32>
      %c1_i32_210 = arith.constant 1 : i32
      %252 = arith.addi %193, %c1_i32_210 : i32
      %c2_i32_211 = arith.constant 2 : i32
      %253 = arith.addi %252, %c2_i32_211 : i32
      %c1_212 = arith.constant 1 : index
      %254 = arith.index_cast %253 : i32 to index
      %c0_213 = arith.constant 0 : index
      %255 = vector.load %arg6[%c1_212, %254, %c0_213] : memref<2x16x128xf32, #tpu.memory_space<vmem>>, vector<1x1x128xf32>
      %256 = vector.shape_cast %255 : vector<1x1x128xf32> to vector<1x128xf32>
      %257 = vector.shape_cast %251 : vector<1x128xf32> to vector<1x1x128xf32>
      tpu.vector_store %arg6[%c1_212, %254, %c0_213], %257 {strides = array<i32>} : memref<2x16x128xf32, #tpu.memory_space<vmem>>, vector<1x1x128xf32>,
    } else {
    }
    %c3_i32_197 = arith.constant 3 : i32
    %235 = arith.cmpi sgt, %201, %c3_i32_197 : i32
    %236 = arith.extui %235 : i1 to i32
    %c0_i32_198 = arith.constant 0 : i32
    %237 = arith.cmpi ne, %236, %c0_i32_198 : i32
    scf.if %237 {
      %c1_207 = arith.constant 1 : index
      %c3_208 = arith.constant 3 : index
      %c0_209 = arith.constant 0 : index
      %250 = vector.load %arg5[%c1_207, %c3_208, %c0_209] : memref<2x8x128xf32, #tpu.memory_space<vmem>>, vector<1x1x128xf32>
      %251 = vector.shape_cast %250 : vector<1x1x128xf32> to vector<1x128xf32>
      %c1_i32_210 = arith.constant 1 : i32
      %252 = arith.addi %193, %c1_i32_210 : i32
      %c3_i32_211 = arith.constant 3 : i32
      %253 = arith.addi %252, %c3_i32_211 : i32
      %c1_212 = arith.constant 1 : index
      %254 = arith.index_cast %253 : i32 to index
      %c0_213 = arith.constant 0 : index
      %255 = vector.load %arg6[%c1_212, %254, %c0_213] : memref<2x16x128xf32, #tpu.memory_space<vmem>>, vector<1x1x128xf32>
      %256 = vector.shape_cast %255 : vector<1x1x128xf32> to vector<1x128xf32>
      %257 = vector.shape_cast %251 : vector<1x128xf32> to vector<1x1x128xf32>
      tpu.vector_store %arg6[%c1_212, %254, %c0_213], %257 {strides = array<i32>} : memref<2x16x128xf32, #tpu.memory_space<vmem>>, vector<1x1x128xf32>,
    } else {
    }
    %c4_i32_199 = arith.constant 4 : i32
    %238 = arith.cmpi sgt, %201, %c4_i32_199 : i32
    %239 = arith.extui %238 : i1 to i32
    %c0_i32_200 = arith.constant 0 : i32
    %240 = arith.cmpi ne, %239, %c0_i32_200 : i32
    scf.if %240 {
      %c1_207 = arith.constant 1 : index
      %c4_208 = arith.constant 4 : index
      %c0_209 = arith.constant 0 : index
      %250 = vector.load %arg5[%c1_207, %c4_208, %c0_209] : memref<2x8x128xf32, #tpu.memory_space<vmem>>, vector<1x1x128xf32>
      %251 = vector.shape_cast %250 : vector<1x1x128xf32> to vector<1x128xf32>
      %c1_i32_210 = arith.constant 1 : i32
      %252 = arith.addi %193, %c1_i32_210 : i32
      %c4_i32_211 = arith.constant 4 : i32
      %253 = arith.addi %252, %c4_i32_211 : i32
      %c1_212 = arith.constant 1 : index
      %254 = arith.index_cast %253 : i32 to index
      %c0_213 = arith.constant 0 : index
      %255 = vector.load %arg6[%c1_212, %254, %c0_213] : memref<2x16x128xf32, #tpu.memory_space<vmem>>, vector<1x1x128xf32>
      %256 = vector.shape_cast %255 : vector<1x1x128xf32> to vector<1x128xf32>
      %257 = vector.shape_cast %251 : vector<1x128xf32> to vector<1x1x128xf32>
      tpu.vector_store %arg6[%c1_212, %254, %c0_213], %257 {strides = array<i32>} : memref<2x16x128xf32, #tpu.memory_space<vmem>>, vector<1x1x128xf32>,
    } else {
    }
    %c5_i32_201 = arith.constant 5 : i32
    %241 = arith.cmpi sgt, %201, %c5_i32_201 : i32
    %242 = arith.extui %241 : i1 to i32
    %c0_i32_202 = arith.constant 0 : i32
    %243 = arith.cmpi ne, %242, %c0_i32_202 : i32
    scf.if %243 {
      %c1_207 = arith.constant 1 : index
      %c5_208 = arith.constant 5 : index
      %c0_209 = arith.constant 0 : index
      %250 = vector.load %arg5[%c1_207, %c5_208, %c0_209] : memref<2x8x128xf32, #tpu.memory_space<vmem>>, vector<1x1x128xf32>
      %251 = vector.shape_cast %250 : vector<1x1x128xf32> to vector<1x128xf32>
      %c1_i32_210 = arith.constant 1 : i32
      %252 = arith.addi %193, %c1_i32_210 : i32
      %c5_i32_211 = arith.constant 5 : i32
      %253 = arith.addi %252, %c5_i32_211 : i32
      %c1_212 = arith.constant 1 : index
      %254 = arith.index_cast %253 : i32 to index
      %c0_213 = arith.constant 0 : index
      %255 = vector.load %arg6[%c1_212, %254, %c0_213] : memref<2x16x128xf32, #tpu.memory_space<vmem>>, vector<1x1x128xf32>
      %256 = vector.shape_cast %255 : vector<1x1x128xf32> to vector<1x128xf32>
      %257 = vector.shape_cast %251 : vector<1x128xf32> to vector<1x1x128xf32>
      tpu.vector_store %arg6[%c1_212, %254, %c0_213], %257 {strides = array<i32>} : memref<2x16x128xf32, #tpu.memory_space<vmem>>, vector<1x1x128xf32>,
    } else {
    }
    %c6_i32_203 = arith.constant 6 : i32
    %244 = arith.cmpi sgt, %201, %c6_i32_203 : i32
    %245 = arith.extui %244 : i1 to i32
    %c0_i32_204 = arith.constant 0 : i32
    %246 = arith.cmpi ne, %245, %c0_i32_204 : i32
    scf.if %246 {
      %c1_207 = arith.constant 1 : index
      %c6_208 = arith.constant 6 : index
      %c0_209 = arith.constant 0 : index
      %250 = vector.load %arg5[%c1_207, %c6_208, %c0_209] : memref<2x8x128xf32, #tpu.memory_space<vmem>>, vector<1x1x128xf32>
      %251 = vector.shape_cast %250 : vector<1x1x128xf32> to vector<1x128xf32>
      %c1_i32_210 = arith.constant 1 : i32
      %252 = arith.addi %193, %c1_i32_210 : i32
      %c6_i32_211 = arith.constant 6 : i32
      %253 = arith.addi %252, %c6_i32_211 : i32
      %c1_212 = arith.constant 1 : index
      %254 = arith.index_cast %253 : i32 to index
      %c0_213 = arith.constant 0 : index
      %255 = vector.load %arg6[%c1_212, %254, %c0_213] : memref<2x16x128xf32, #tpu.memory_space<vmem>>, vector<1x1x128xf32>
      %256 = vector.shape_cast %255 : vector<1x1x128xf32> to vector<1x128xf32>
      %257 = vector.shape_cast %251 : vector<1x128xf32> to vector<1x1x128xf32>
      tpu.vector_store %arg6[%c1_212, %254, %c0_213], %257 {strides = array<i32>} : memref<2x16x128xf32, #tpu.memory_space<vmem>>, vector<1x1x128xf32>,
    } else {
    }
    %c7_i32_205 = arith.constant 7 : i32
    %247 = arith.cmpi sgt, %201, %c7_i32_205 : i32
    %248 = arith.extui %247 : i1 to i32
    %c0_i32_206 = arith.constant 0 : i32
    %249 = arith.cmpi ne, %248, %c0_i32_206 : i32
    scf.if %249 {
      %c1_207 = arith.constant 1 : index
      %c7_208 = arith.constant 7 : index
      %c0_209 = arith.constant 0 : index
      %250 = vector.load %arg5[%c1_207, %c7_208, %c0_209] : memref<2x8x128xf32, #tpu.memory_space<vmem>>, vector<1x1x128xf32>
      %251 = vector.shape_cast %250 : vector<1x1x128xf32> to vector<1x128xf32>
      %c1_i32_210 = arith.constant 1 : i32
      %252 = arith.addi %193, %c1_i32_210 : i32
      %c7_i32_211 = arith.constant 7 : i32
      %253 = arith.addi %252, %c7_i32_211 : i32
      %c1_212 = arith.constant 1 : index
      %254 = arith.index_cast %253 : i32 to index
      %c0_213 = arith.constant 0 : index
      %255 = vector.load %arg6[%c1_212, %254, %c0_213] : memref<2x16x128xf32, #tpu.memory_space<vmem>>, vector<1x1x128xf32>
      %256 = vector.shape_cast %255 : vector<1x1x128xf32> to vector<1x128xf32>
      %257 = vector.shape_cast %251 : vector<1x128xf32> to vector<1x1x128xf32>
      tpu.vector_store %arg6[%c1_212, %254, %c0_213], %257 {strides = array<i32>} : memref<2x16x128xf32, #tpu.memory_space<vmem>>, vector<1x1x128xf32>,
    } else {
    }
    return
  }
  func.func @transform_0(%arg0: i32, %arg1: memref<2x16xi32, #tpu.memory_space<smem>>, %arg2: memref<2xi32, #tpu.memory_space<smem>>, %arg3: memref<2xi32, #tpu.memory_space<smem>>) -> (i32, i32) {
    %c0_i32 = arith.constant 0 : i32
    %c0_i32_0 = arith.constant 0 : i32
    %c0_i32_1 = arith.constant 0 : i32
    return %c0_i32, %c0_i32_0 : i32, i32
  }
  func.func @transform_1(%arg0: i32, %arg1: memref<2x16xi32, #tpu.memory_space<smem>>, %arg2: memref<2xi32, #tpu.memory_space<smem>>, %arg3: memref<2xi32, #tpu.memory_space<smem>>) -> (i32, i32, i32) {
    %c0_i32 = arith.constant 0 : i32
    %c0_i32_0 = arith.constant 0 : i32
    %c0_i32_1 = arith.constant 0 : i32
    %c0_i32_2 = arith.constant 0 : i32
    return %c0_i32, %c0_i32_0, %c0_i32_1 : i32, i32, i32
  }
  func.func @transform_2(%arg0: i32, %arg1: memref<2x16xi32, #tpu.memory_space<smem>>, %arg2: memref<2xi32, #tpu.memory_space<smem>>, %arg3: memref<2xi32, #tpu.memory_space<smem>>) -> (i32, i32, i32) {
    %c0_i32 = arith.constant 0 : i32
    %c0_i32_0 = arith.constant 0 : i32
    %c0_i32_1 = arith.constant 0 : i32
    %c0_i32_2 = arith.constant 0 : i32
    return %c0_i32, %c0_i32_0, %c0_i32_1 : i32, i32, i32
  }
}

</mosaic_0001>

<llo_original>
// kernel: tpu_custom_call.1
$region0: #{tpu_custom_call.1}
  #allocation0 [shape = 'u32[]', space=smem, size = 0x4, offset = 0x4, fixed_abs, tag = 'smem constant byte address 0x4 - core index']
  #allocation1 [shape = 'u32[144,128]{1,0:T(1,128)}', space=vmem, size = 0x12000, scoped, tag = 'internal scratch']
  #allocation2 [shape = 's32[1]{0}', space=sflag, size = 0x4, scoped, tag = 'scoped memory for tpu_custom_call.1']
  #allocation3 [shape = 'u8[1024]{0}', space=smem, size = 0x400, scoped, tag = 'prefetched SMEM operand 0']
  #allocation4 [shape = 'u8[512]{0}', space=smem, size = 0x200, scoped, tag = 'prefetched SMEM operand 1']
  #allocation5 [shape = 'u8[512]{0}', space=smem, size = 0x200, scoped, tag = 'prefetched SMEM operand 2']
  %s0 = inlined_call_operand.hbm [shape: s32[2,16], index: 0, kind: input, shape index: {}]
  %s1 = inlined_call_operand.vmem [shape: s32[2], index: 1, kind: input, shape index: {}]
  %s2 = inlined_call_operand.vmem [shape: s32[2], index: 2, kind: input, shape index: {}]
  %s3 = inlined_call_operand.hbm [shape: f32[64,128], index: 3, kind: input, shape index: {}]
  %s4 = inlined_call_operand.hbm [shape: f32[2,8,128], index: 4, kind: input, shape index: {}]
  %s5 = inlined_call_operand.hbm [shape: f32[2,16,128], index: 5, kind: output, shape index: {}]
  %s6 = sld [smem:[#allocation0]]
  $region90: #{tpu_custom_call.1} parent=0
    _
  %s8 = ssub.s32 1, %s6
  %s9 = scalar_select 0, %s8, %s6
  %11 = dma.hbm_to_smem %s0, 32, [#allocation3], [#allocation2]
  %s12 = sshll.u32 %s1, 4
  %s13 = int_to_ptr.vmem [resolvable:$true] %s12
  %15 = dma.vmem_to_smem %s13, 16, [#allocation4], [#allocation2]
  %s16 = sshll.u32 %s2, 4
  %s17 = int_to_ptr.vmem [resolvable:$true] %s16
  %19 = dma.vmem_to_smem %s17, 16, [#allocation5], [#allocation2]
  %20 = dma.done [#allocation2], 64
  %21 = sfence
  $region1: #{tpu_custom_call.1} parent=0
    #allocation6 [shape = 'u8[32768]{0}', space=vmem, size = 0x8000, scoped, tag = 'input window, operand 3, single buffered']
    #allocation7 [shape = 's32[1]{0}', space=sflag, size = 0x4, scoped, tag = 'scoped memory for tpu_custom_call.1']
    #allocation8 [shape = 's32[1]{0}', space=sflag, size = 0x4, scoped, tag = 'scoped memory for tpu_custom_call.1']
    #allocation9 [shape = 'u8[8192]{0}', space=vmem, size = 0x2000, scoped, tag = 'input window, operand 4, single buffered']
    #allocation10 [shape = 's32[1]{0}', space=sflag, size = 0x4, scoped, tag = 'scoped memory for tpu_custom_call.1']
    #allocation11 [shape = 'u8[16384]{0}', space=vmem, size = 0x4000, scoped, tag = 'output window, operand 0, single buffered']
    %22 = vsyncpa [#allocation7], 0
    %23 = vsyncpa [#allocation10], 0
    %24 = vsyncpa [#allocation8], 0
    // Predicated region
    $region2: #{tpu_custom_call.1} parent=1 // pred_check
      _
    $region3: #{tpu_custom_call.1} parent=1 // pred_check_branch
      %26 = sbr.rel (0) target = $region5
    $region4: #{tpu_custom_call.1} parent=1 // pred_region
      %s28 = ssub.s32 1024, 1024
      %29 = vsyncadd [#allocation7], %s28
      %s30 = sshll.u32 [#allocation6], 4
      %s31 = int_to_ptr.vmem [resolvable:$true] %s30
      %36 = dma.hbm_to_vmem [thread:$0]  %s3, 1024, %s31, [#allocation7], 128, 128, 8
    $region5: #{tpu_custom_call.1} parent=1 // pred_fallthru
      _
    // Predicated region
    $region6: #{tpu_custom_call.1} parent=1 // pred_check
      _
    $region7: #{tpu_custom_call.1} parent=1 // pred_check_branch
      %38 = sbr.rel (0) target = $region9
    $region8: #{tpu_custom_call.1} parent=1 // pred_region
      %s40 = ssub.s32 256, 256
      %41 = vsyncadd [#allocation10], %s40
      %s42 = sshll.u32 [#allocation9], 4
      %s43 = int_to_ptr.vmem [resolvable:$true] %s42
      %48 = dma.hbm_to_vmem [thread:$0]  %s4, 256, %s43, [#allocation10], 128, 128, 8
    $region9: #{tpu_custom_call.1} parent=1 // pred_fallthru
      _
    // Predicated region
    $region10: #{tpu_custom_call.1} parent=1 // pred_check
      _
    $region11: #{tpu_custom_call.1} parent=1 // pred_check_branch
      %50 = sbr.rel (0) target = $region13
    $region12: #{tpu_custom_call.1} parent=1 // pred_region
      %51 = dma.done [#allocation7], 1024
    $region13: #{tpu_custom_call.1} parent=1 // pred_fallthru
      _
    // Predicated region
    $region14: #{tpu_custom_call.1} parent=1 // pred_check
      _
    $region15: #{tpu_custom_call.1} parent=1 // pred_check_branch
      %53 = sbr.rel (0) target = $region17
    $region16: #{tpu_custom_call.1} parent=1 // pred_region
      %54 = dma.done [#allocation10], 256
    $region17: #{tpu_custom_call.1} parent=1 // pred_fallthru
      _
    %s55 = sld [smem:[#allocation3]]
    %s56 = scalar_lea.vmem [#allocation6], %s55
    %v57 = vld [vmem:[%s56] sm:$0x1]
    %58 = vst [vmem:[#allocation11] sm:$0x1] %v57
    %s59 = sld [smem:[#allocation3 + $0x1]]
    %s60 = scalar_lea.vmem [#allocation6], %s59
    %v61 = vld [vmem:[%s60] sm:$0x1]
    %62 = vst [vmem:[#allocation11 + $0x1] sm:$0x1] %v61
    %s63 = sld [smem:[#allocation3 + $0x2]]
    %s64 = scalar_lea.vmem [#allocation6], %s63
    %v65 = vld [vmem:[%s64] sm:$0x1]
    %66 = vst [vmem:[#allocation11 + $0x2] sm:$0x1] %v65
    %s67 = sld [smem:[#allocation3 + $0x3]]
    %s68 = scalar_lea.vmem [#allocation6], %s67
    %v69 = vld [vmem:[%s68] sm:$0x1]
    %70 = vst [vmem:[#allocation11 + $0x3] sm:$0x1] %v69
    %s71 = sld [smem:[#allocation3 + $0x4]]
    %s72 = scalar_lea.vmem [#allocation6], %s71
    %v73 = vld [vmem:[%s72] sm:$0x1]
    %74 = vst [vmem:[#allocation11 + $0x4] sm:$0x1] %v73
    %s75 = sld [smem:[#allocation3 + $0x5]]
    %s76 = scalar_lea.vmem [#allocation6], %s75
    %v77 = vld [vmem:[%s76] sm:$0x1]
    %78 = vst [vmem:[#allocation11 + $0x5] sm:$0x1] %v77
    %s79 = sld [smem:[#allocation3 + $0x6]]
    %s80 = scalar_lea.vmem [#allocation6], %s79
    %v81 = vld [vmem:[%s80] sm:$0x1]
    %82 = vst [vmem:[#allocation11 + $0x6] sm:$0x1] %v81
    %s83 = sld [smem:[#allocation3 + $0x7]]
    %s84 = scalar_lea.vmem [#allocation6], %s83
    %v85 = vld [vmem:[%s84] sm:$0x1]
    %86 = vst [vmem:[#allocation11 + $0x7] sm:$0x1] %v85
    %s87 = sld [smem:[#allocation3 + $0x8]]
    %s88 = scalar_lea.vmem [#allocation6], %s87
    %v89 = vld [vmem:[%s88] sm:$0x1]
    %90 = vst [vmem:[#allocation11 + $0x8] sm:$0x1] %v89
    %s91 = sld [smem:[#allocation3 + $0x9]]
    %s92 = scalar_lea.vmem [#allocation6], %s91
    %v93 = vld [vmem:[%s92] sm:$0x1]
    %94 = vst [vmem:[#allocation11 + $0x9] sm:$0x1] %v93
    %s95 = sld [smem:[#allocation3 + $0xa]]
    %s96 = scalar_lea.vmem [#allocation6], %s95
    %v97 = vld [vmem:[%s96] sm:$0x1]
    %98 = vst [vmem:[#allocation11 + $0xa] sm:$0x1] %v97
    %s99 = sld [smem:[#allocation3 + $0xb]]
    %s100 = scalar_lea.vmem [#allocation6], %s99
    %v101 = vld [vmem:[%s100] sm:$0x1]
    %102 = vst [vmem:[#allocation11 + $0xb] sm:$0x1] %v101
    %s103 = sld [smem:[#allocation3 + $0xc]]
    %s104 = scalar_lea.vmem [#allocation6], %s103
    %v105 = vld [vmem:[%s104] sm:$0x1]
    %106 = vst [vmem:[#allocation11 + $0xc] sm:$0x1] %v105
    %s107 = sld [smem:[#allocation3 + $0xd]]
    %s108 = scalar_lea.vmem [#allocation6], %s107
    %v109 = vld [vmem:[%s108] sm:$0x1]
    %110 = vst [vmem:[#allocation11 + $0xd] sm:$0x1] %v109
    %s111 = sld [smem:[#allocation3 + $0xe]]
    %s112 = scalar_lea.vmem [#allocation6], %s111
    %v113 = vld [vmem:[%s112] sm:$0x1]
    %114 = vst [vmem:[#allocation11 + $0xe] sm:$0x1] %v113
    %s115 = sld [smem:[#allocation3 + $0xf]]
    %s116 = scalar_lea.vmem [#allocation6], %s115
    %v117 = vld [vmem:[%s116] sm:$0x1]
    %118 = vst [vmem:[#allocation11 + $0xf] sm:$0x1] %v117
    %s119 = sld [smem:[#allocation3 + $0x80]]
    %s120 = scalar_lea.vmem [#allocation6], %s119
    %v121 = vld [vmem:[%s120] sm:$0x1]
    %s122 = scalar_lea.vmem [#allocation11], 16
    %123 = vst [vmem:[%s122] sm:$0x1] %v121
    %s124 = sld [smem:[#allocation3 + $0x81]]
    %s125 = scalar_lea.vmem [#allocation6], %s124
    %v126 = vld [vmem:[%s125] sm:$0x1]
    %127 = vst [vmem:[%s122 + $0x1] sm:$0x1] %v126
    %s128 = sld [smem:[#allocation3 + $0x82]]
    %s129 = scalar_lea.vmem [#allocation6], %s128
    %v130 = vld [vmem:[%s129] sm:$0x1]
    %131 = vst [vmem:[%s122 + $0x2] sm:$0x1] %v130
    %s132 = sld [smem:[#allocation3 + $0x83]]
    %s133 = scalar_lea.vmem [#allocation6], %s132
    %v134 = vld [vmem:[%s133] sm:$0x1]
    %135 = vst [vmem:[%s122 + $0x3] sm:$0x1] %v134
    %s136 = sld [smem:[#allocation3 + $0x84]]
    %s137 = scalar_lea.vmem [#allocation6], %s136
    %v138 = vld [vmem:[%s137] sm:$0x1]
    %139 = vst [vmem:[%s122 + $0x4] sm:$0x1] %v138
    %s140 = sld [smem:[#allocation3 + $0x85]]
    %s141 = scalar_lea.vmem [#allocation6], %s140
    %v142 = vld [vmem:[%s141] sm:$0x1]
    %143 = vst [vmem:[%s122 + $0x5] sm:$0x1] %v142
    %s144 = sld [smem:[#allocation3 + $0x86]]
    %s145 = scalar_lea.vmem [#allocation6], %s144
    %v146 = vld [vmem:[%s145] sm:$0x1]
    %147 = vst [vmem:[%s122 + $0x6] sm:$0x1] %v146
    %s148 = sld [smem:[#allocation3 + $0x87]]
    %s149 = scalar_lea.vmem [#allocation6], %s148
    %v150 = vld [vmem:[%s149] sm:$0x1]
    %151 = vst [vmem:[%s122 + $0x7] sm:$0x1] %v150
    %s152 = sld [smem:[#allocation3 + $0x88]]
    %s153 = scalar_lea.vmem [#allocation6], %s152
    %v154 = vld [vmem:[%s153] sm:$0x1]
    %155 = vst [vmem:[%s122 + $0x8] sm:$0x1] %v154
    %s156 = sld [smem:[#allocation3 + $0x89]]
    %s157 = scalar_lea.vmem [#allocation6], %s156
    %v158 = vld [vmem:[%s157] sm:$0x1]
    %159 = vst [vmem:[%s122 + $0x9] sm:$0x1] %v158
    %s160 = sld [smem:[#allocation3 + $0x8a]]
    %s161 = scalar_lea.vmem [#allocation6], %s160
    %v162 = vld [vmem:[%s161] sm:$0x1]
    %163 = vst [vmem:[%s122 + $0xa] sm:$0x1] %v162
    %s164 = sld [smem:[#allocation3 + $0x8b]]
    %s165 = scalar_lea.vmem [#allocation6], %s164
    %v166 = vld [vmem:[%s165] sm:$0x1]
    %167 = vst [vmem:[%s122 + $0xb] sm:$0x1] %v166
    %s168 = sld [smem:[#allocation3 + $0x8c]]
    %s169 = scalar_lea.vmem [#allocation6], %s168
    %v170 = vld [vmem:[%s169] sm:$0x1]
    %171 = vst [vmem:[%s122 + $0xc] sm:$0x1] %v170
    %s172 = sld [smem:[#allocation3 + $0x8d]]
    %s173 = scalar_lea.vmem [#allocation6], %s172
    %v174 = vld [vmem:[%s173] sm:$0x1]
    %175 = vst [vmem:[%s122 + $0xd] sm:$0x1] %v174
    %s176 = sld [smem:[#allocation3 + $0x8e]]
    %s177 = scalar_lea.vmem [#allocation6], %s176
    %v178 = vld [vmem:[%s177] sm:$0x1]
    %179 = vst [vmem:[%s122 + $0xe] sm:$0x1] %v178
    %s180 = sld [smem:[#allocation3 + $0x8f]]
    %s181 = scalar_lea.vmem [#allocation6], %s180
    %v182 = vld [vmem:[%s181] sm:$0x1]
    %183 = vst [vmem:[%s122 + $0xf] sm:$0x1] %v182
    %s184 = sld [smem:[#allocation4]]
    %s185 = sld [smem:[#allocation4 + $0x1]]
    %s186 = ssub.s32 15, %s184
    %s187 = sld [smem:[#allocation5]]
    %p188 = scmp.lt.s32.totalorder %s186, %s187
    %s189 = scalar_select %p188, %s186, %s187
    %s190 = ssub.s32 15, %s185
    %s191 = sld [smem:[#allocation5 + $0x1]]
    %p192 = scmp.lt.s32.totalorder %s190, %s191
    %s193 = scalar_select %p192, %s190, %s191
    %p194 = scmp.gt.s32.totalorder %s189, 0
    // Predicated region
    $region18: #{tpu_custom_call.1} parent=1 // pred_check
      %p195 = pneg %p194
    $region19: #{tpu_custom_call.1} parent=1 // pred_check_branch
      %197 = sbr.rel (%p195) target = $region21
    $region20: #{tpu_custom_call.1} parent=1 // pred_region
      %v198 = vld [vmem:[#allocation9] sm:$0x1]
      %s199 = sadd.s32 %s184, 1
      %s200 = scalar_lea.vmem [#allocation11], %s199
      %201 = vst [vmem:[%s200] sm:$0x1] %v198
    $region21: #{tpu_custom_call.1} parent=1 // pred_fallthru
      _
    %p202 = scmp.gt.s32.totalorder %s189, 1
    // Predicated region
    $region22: #{tpu_custom_call.1} parent=1 // pred_check
      %p203 = pneg %p202
    $region23: #{tpu_custom_call.1} parent=1 // pred_check_branch
      %205 = sbr.rel (%p203) target = $region25
    $region24: #{tpu_custom_call.1} parent=1 // pred_region
      %v206 = vld [vmem:[#allocation9 + $0x1] sm:$0x1]
      %s207 = sadd.s32 %s184, 2
      %s208 = scalar_lea.vmem [#allocation11], %s207
      %209 = vst [vmem:[%s208] sm:$0x1] %v206
    $region25: #{tpu_custom_call.1} parent=1 // pred_fallthru
      _
    %p210 = scmp.gt.s32.totalorder %s189, 2
    // Predicated region
    $region26: #{tpu_custom_call.1} parent=1 // pred_check
      %p211 = pneg %p210
    $region27: #{tpu_custom_call.1} parent=1 // pred_check_branch
      %213 = sbr.rel (%p211) target = $region29
    $region28: #{tpu_custom_call.1} parent=1 // pred_region
      %v214 = vld [vmem:[#allocation9 + $0x2] sm:$0x1]
      %s215 = sadd.s32 %s184, 3
      %s216 = scalar_lea.vmem [#allocation11], %s215
      %217 = vst [vmem:[%s216] sm:$0x1] %v214
    $region29: #{tpu_custom_call.1} parent=1 // pred_fallthru
      _
    %p218 = scmp.gt.s32.totalorder %s189, 3
    // Predicated region
    $region30: #{tpu_custom_call.1} parent=1 // pred_check
      %p219 = pneg %p218
    $region31: #{tpu_custom_call.1} parent=1 // pred_check_branch
      %221 = sbr.rel (%p219) target = $region33
    $region32: #{tpu_custom_call.1} parent=1 // pred_region
      %v222 = vld [vmem:[#allocation9 + $0x3] sm:$0x1]
      %s223 = sadd.s32 %s184, 4
      %s224 = scalar_lea.vmem [#allocation11], %s223
      %225 = vst [vmem:[%s224] sm:$0x1] %v222
    $region33: #{tpu_custom_call.1} parent=1 // pred_fallthru
      _
    %p226 = scmp.gt.s32.totalorder %s189, 4
    // Predicated region
    $region34: #{tpu_custom_call.1} parent=1 // pred_check
      %p227 = pneg %p226
    $region35: #{tpu_custom_call.1} parent=1 // pred_check_branch
      %229 = sbr.rel (%p227) target = $region37
    $region36: #{tpu_custom_call.1} parent=1 // pred_region
      %v230 = vld [vmem:[#allocation9 + $0x4] sm:$0x1]
      %s231 = sadd.s32 %s184, 5
      %s232 = scalar_lea.vmem [#allocation11], %s231
      %233 = vst [vmem:[%s232] sm:$0x1] %v230
    $region37: #{tpu_custom_call.1} parent=1 // pred_fallthru
      _
    %p234 = scmp.gt.s32.totalorder %s189, 5
    // Predicated region
    $region38: #{tpu_custom_call.1} parent=1 // pred_check
      %p235 = pneg %p234
    $region39: #{tpu_custom_call.1} parent=1 // pred_check_branch
      %237 = sbr.rel (%p235) target = $region41
    $region40: #{tpu_custom_call.1} parent=1 // pred_region
      %v238 = vld [vmem:[#allocation9 + $0x5] sm:$0x1]
      %s239 = sadd.s32 %s184, 6
      %s240 = scalar_lea.vmem [#allocation11], %s239
      %241 = vst [vmem:[%s240] sm:$0x1] %v238
    $region41: #{tpu_custom_call.1} parent=1 // pred_fallthru
      _
    %p242 = scmp.gt.s32.totalorder %s189, 6
    // Predicated region
    $region42: #{tpu_custom_call.1} parent=1 // pred_check
      %p243 = pneg %p242
    $region43: #{tpu_custom_call.1} parent=1 // pred_check_branch
      %245 = sbr.rel (%p243) target = $region45
    $region44: #{tpu_custom_call.1} parent=1 // pred_region
      %v246 = vld [vmem:[#allocation9 + $0x6] sm:$0x1]
      %s247 = sadd.s32 %s184, 7
      %s248 = scalar_lea.vmem [#allocation11], %s247
      %249 = vst [vmem:[%s248] sm:$0x1] %v246
    $region45: #{tpu_custom_call.1} parent=1 // pred_fallthru
      _
    %p250 = scmp.gt.s32.totalorder %s189, 7
    // Predicated region
    $region46: #{tpu_custom_call.1} parent=1 // pred_check
      %p251 = pneg %p250
    $region47: #{tpu_custom_call.1} parent=1 // pred_check_branch
      %253 = sbr.rel (%p251) target = $region49
    $region48: #{tpu_custom_call.1} parent=1 // pred_region
      %v254 = vld [vmem:[#allocation9 + $0x7] sm:$0x1]
      %s255 = sadd.s32 %s184, 8
      %s256 = scalar_lea.vmem [#allocation11], %s255
      %257 = vst [vmem:[%s256] sm:$0x1] %v254
    $region49: #{tpu_custom_call.1} parent=1 // pred_fallthru
      _
    %p258 = scmp.gt.s32.totalorder %s193, 0
    // Predicated region
    $region50: #{tpu_custom_call.1} parent=1 // pred_check
      %p259 = pneg %p258
    $region51: #{tpu_custom_call.1} parent=1 // pred_check_branch
      %261 = sbr.rel (%p259) target = $region53
    $region52: #{tpu_custom_call.1} parent=1 // pred_region
      %s262 = scalar_lea.vmem [#allocation9], 8
      %v263 = vld [vmem:[%s262] sm:$0x1]
      %s264 = sadd.s32 %s185, 1
      %s265 = sadd.s32 %s264, 16
      %s266 = scalar_lea.vmem [#allocation11], %s265
      %267 = vst [vmem:[%s266] sm:$0x1] %v263
    $region53: #{tpu_custom_call.1} parent=1 // pred_fallthru
      _
    %p268 = scmp.gt.s32.totalorder %s193, 1
    // Predicated region
    $region54: #{tpu_custom_call.1} parent=1 // pred_check
      %p269 = pneg %p268
    $region55: #{tpu_custom_call.1} parent=1 // pred_check_branch
      %271 = sbr.rel (%p269) target = $region57
    $region56: #{tpu_custom_call.1} parent=1 // pred_region
      %s272 = scalar_lea.vmem [#allocation9], 8
      %v273 = vld [vmem:[%s272 + $0x1] sm:$0x1]
      %s274 = sadd.s32 %s185, 2
      %s275 = sadd.s32 %s274, 16
      %s276 = scalar_lea.vmem [#allocation11], %s275
      %277 = vst [vmem:[%s276] sm:$0x1] %v273
    $region57: #{tpu_custom_call.1} parent=1 // pred_fallthru
      _
    %p278 = scmp.gt.s32.totalorder %s193, 2
    // Predicated region
    $region58: #{tpu_custom_call.1} parent=1 // pred_check
      %p279 = pneg %p278
    $region59: #{tpu_custom_call.1} parent=1 // pred_check_branch
      %281 = sbr.rel (%p279) target = $region61
    $region60: #{tpu_custom_call.1} parent=1 // pred_region
      %s282 = scalar_lea.vmem [#allocation9], 8
      %v283 = vld [vmem:[%s282 + $0x2] sm:$0x1]
      %s284 = sadd.s32 %s185, 3
      %s285 = sadd.s32 %s284, 16
      %s286 = scalar_lea.vmem [#allocation11], %s285
      %287 = vst [vmem:[%s286] sm:$0x1] %v283
    $region61: #{tpu_custom_call.1} parent=1 // pred_fallthru
      _
    %p288 = scmp.gt.s32.totalorder %s193, 3
    // Predicated region
    $region62: #{tpu_custom_call.1} parent=1 // pred_check
      %p289 = pneg %p288
    $region63: #{tpu_custom_call.1} parent=1 // pred_check_branch
      %291 = sbr.rel (%p289) target = $region65
    $region64: #{tpu_custom_call.1} parent=1 // pred_region
      %s292 = scalar_lea.vmem [#allocation9], 8
      %v293 = vld [vmem:[%s292 + $0x3] sm:$0x1]
      %s294 = sadd.s32 %s185, 4
      %s295 = sadd.s32 %s294, 16
      %s296 = scalar_lea.vmem [#allocation11], %s295
      %297 = vst [vmem:[%s296] sm:$0x1] %v293
    $region65: #{tpu_custom_call.1} parent=1 // pred_fallthru
      _
    %p298 = scmp.gt.s32.totalorder %s193, 4
    // Predicated region
    $region66: #{tpu_custom_call.1} parent=1 // pred_check
      %p299 = pneg %p298
    $region67: #{tpu_custom_call.1} parent=1 // pred_check_branch
      %301 = sbr.rel (%p299) target = $region69
    $region68: #{tpu_custom_call.1} parent=1 // pred_region
      %s302 = scalar_lea.vmem [#allocation9], 8
      %v303 = vld [vmem:[%s302 + $0x4] sm:$0x1]
      %s304 = sadd.s32 %s185, 5
      %s305 = sadd.s32 %s304, 16
      %s306 = scalar_lea.vmem [#allocation11], %s305
      %307 = vst [vmem:[%s306] sm:$0x1] %v303
    $region69: #{tpu_custom_call.1} parent=1 // pred_fallthru
      _
    %p308 = scmp.gt.s32.totalorder %s193, 5
    // Predicated region
    $region70: #{tpu_custom_call.1} parent=1 // pred_check
      %p309 = pneg %p308
    $region71: #{tpu_custom_call.1} parent=1 // pred_check_branch
      %311 = sbr.rel (%p309) target = $region73
    $region72: #{tpu_custom_call.1} parent=1 // pred_region
      %s312 = scalar_lea.vmem [#allocation9], 8
      %v313 = vld [vmem:[%s312 + $0x5] sm:$0x1]
      %s314 = sadd.s32 %s185, 6
      %s315 = sadd.s32 %s314, 16
      %s316 = scalar_lea.vmem [#allocation11], %s315
      %317 = vst [vmem:[%s316] sm:$0x1] %v313
    $region73: #{tpu_custom_call.1} parent=1 // pred_fallthru
      _
    %p318 = scmp.gt.s32.totalorder %s193, 6
    // Predicated region
    $region74: #{tpu_custom_call.1} parent=1 // pred_check
      %p319 = pneg %p318
    $region75: #{tpu_custom_call.1} parent=1 // pred_check_branch
      %321 = sbr.rel (%p319) target = $region77
    $region76: #{tpu_custom_call.1} parent=1 // pred_region
      %s322 = scalar_lea.vmem [#allocation9], 8
      %v323 = vld [vmem:[%s322 + $0x6] sm:$0x1]
      %s324 = sadd.s32 %s185, 7
      %s325 = sadd.s32 %s324, 16
      %s326 = scalar_lea.vmem [#allocation11], %s325
      %327 = vst [vmem:[%s326] sm:$0x1] %v323
    $region77: #{tpu_custom_call.1} parent=1 // pred_fallthru
      _
    %p328 = scmp.gt.s32.totalorder %s193, 7
    // Predicated region
    $region78: #{tpu_custom_call.1} parent=1 // pred_check
      %p329 = pneg %p328
    $region79: #{tpu_custom_call.1} parent=1 // pred_check_branch
      %331 = sbr.rel (%p329) target = $region81
    $region80: #{tpu_custom_call.1} parent=1 // pred_region
      %s332 = scalar_lea.vmem [#allocation9], 8
      %v333 = vld [vmem:[%s332 + $0x7] sm:$0x1]
      %s334 = sadd.s32 %s185, 8
      %s335 = sadd.s32 %s334, 16
      %s336 = scalar_lea.vmem [#allocation11], %s335
      %337 = vst [vmem:[%s336] sm:$0x1] %v333
    $region81: #{tpu_custom_call.1} parent=1 // pred_fallthru
      _
    // Predicated region
    $region82: #{tpu_custom_call.1} parent=1 // pred_check
      _
    $region83: #{tpu_custom_call.1} parent=1 // pred_check_branch
      %339 = sbr.rel (0) target = $region85
    $region84: #{tpu_custom_call.1} parent=1 // pred_region
      %s341 = ssub.s32 512, 512
      %342 = vsyncadd [#allocation8], %s341
      %s343 = sshll.u32 [#allocation11], 4
      %s344 = int_to_ptr.vmem [resolvable:$true] %s343
      %349 = dma.vmem_to_hbm [thread:$0]  %s344, 512, %s5, [#allocation8], 128, 128, 8
    $region85: #{tpu_custom_call.1} parent=1 // pred_fallthru
      _
    // Predicated region
    $region86: #{tpu_custom_call.1} parent=1 // pred_check
      _
    $region87: #{tpu_custom_call.1} parent=1 // pred_check_branch
      %351 = sbr.rel (0) target = $region89
    $region88: #{tpu_custom_call.1} parent=1 // pred_region
      %352 = dma.done [#allocation8], 512
    $region89: #{tpu_custom_call.1} parent=1 // pred_fallthru
      _
    %353 = vsyncpa [#allocation7], 1
    %354 = vsyncpa [#allocation10], 1
    %355 = vsyncpa [#allocation8], 1

</llo_original>
